<compile_context>
chip_gen: v7x
topology: tpu7x:2x2x1
jax: 0.10.0
libtpu: 0.0.40
codegen_flags: <defaults>
</compile_context>

<pallas_src>
import functools

import numpy as np
import jax
import jax.numpy as jnp
from jax.experimental import pallas as pl
from jax.experimental.pallas import tpu as pltpu

K1, S1 = 8, 4          # first conv: kernel 8, stride 4
K2, S2 = 4, 2          # second conv: kernel 4, stride 2
C1, C2 = 16, 32        # conv output channel counts


def _conv_out(size, k, s):
    return (size - k) // s + 1


def _used_extent(o2):
    """Number of conv1 output rows/cols actually read by conv2."""
    return S2 * (o2 - 1) + K2


# ----------------------------------------------------------------------------
# Fused kernel: conv1 + ReLU + conv2 + ReLU + linear, all VMEM-resident.
# Kernel sees per grid step:
#   p1_ref : (up*uq*nb, K1*K1*Cin) bf16   conv1 patches, rows ordered (pos, n)
#   w1_ref : (K1*K1*Cin, C1)       bf16
#   w2_ref : (up*uq*C1, P2*Q2*C2)  bf16   conv2 expressed over the patch slab
#   w3_ref : (P2*Q2*C2, A_pad)     bf16
#   b_ref  : (3, >=128)            f32    packed b1 / b2 / b3 rows
#   o_ref  : (nb, A_pad)           f32    lane-dense output slab
#   yw_ref : (nb, up*uq*C1)        f32    VMEM scratch: lane-dense conv2 input
# ----------------------------------------------------------------------------
def _fused_qnet_kernel(p1_ref, w1_ref, w2_ref, w3_ref, b_ref, o_ref, yw_ref,
                       *, nb, up, uq):
    c1 = w1_ref.shape[1]
    flat2 = w2_ref.shape[1]
    a_pad = w3_ref.shape[1]
    rows = uq * nb

    b1 = b_ref[0:1, 0:c1]                                   # (1, C1) f32

    # ---- conv1 (+bias+ReLU), chunked per row of used conv1 positions -------
    # Each chunk is one (uq*nb, 256) x (256, 16) MXU matmul; its (nb, 16)
    # per-position pieces are scattered into the lane-dense yw slab.
    for pr in range(up):
        chunk = jnp.dot(p1_ref[pr * rows:(pr + 1) * rows, :], w1_ref[...],
                        preferred_element_type=jnp.float32)
        chunk = jnp.maximum(chunk + b1, 0.0)                # (uq*nb, C1) f32
        for q in range(uq):
            k = pr * uq + q
            yw_ref[:, k * c1:(k + 1) * c1] = chunk[q * nb:(q + 1) * nb, :]

    # ---- conv2: ONE lane-dense (nb, up*uq*C1) x (., P2*Q2*C2) matmul --------
    y2 = jnp.dot(yw_ref[...].astype(jnp.bfloat16), w2_ref[...],
                 preferred_element_type=jnp.float32)
    y2 = jnp.maximum(y2 + b_ref[1:2, 0:flat2], 0.0)         # (nb, 128) f32

    # ---- final linear: ONE (nb, 128) x (128, A_pad) matmul, lane-dense out --
    out = jnp.dot(y2.astype(jnp.bfloat16), w3_ref[...],
                  preferred_element_type=jnp.float32)
    o_ref[...] = (out + b_ref[2:3, 0:a_pad]).astype(o_ref.dtype)


# ----------------------------------------------------------------------------
# One-time parameter preparation (host side).  Absorbs torch's
# state.transpose(1, 3) + OIHW layout into the weight re-permutation, builds
# the conv2-over-patch-slab weight, pads n_actions to a lane-dense 128 and
# packs the biases into a single buffer.
# ----------------------------------------------------------------------------
def prepare_params(params, obs_hw):
    H, W = obs_hw
    w1 = np.asarray(params["w1"], np.float32)
    b1 = np.asarray(params["b1"], np.float32)
    w2 = np.asarray(params["w2"], np.float32)
    b2 = np.asarray(params["b2"], np.float32)
    w3 = np.asarray(params["w3"], np.float32)
    b3 = np.asarray(params["b3"], np.float32)

    cin = w1.shape[1]
    c1, c2, a = w1.shape[0], w2.shape[0], w3.shape[0]
    p1h, q1w = _conv_out(H, K1, S1), _conv_out(W, K1, S1)
    p2h, q2w = _conv_out(p1h, K2, S2), _conv_out(q1w, K2, S2)
    up, uq = _used_extent(p2h), _used_extent(q2w)
    flat2 = p2h * q2w * c2
    assert w3.shape[1] == flat2, (w3.shape, flat2)

    # conv weights -> channel-last im2col layout, rows (dh, dw, cin); the
    # (kh, kw) swap absorbs torch's transpose(1, 3) (valid: square kernels).
    w1m = np.transpose(w1, (3, 2, 1, 0)).reshape(K1 * K1 * cin, c1)
    w2m = np.transpose(w2, (3, 2, 1, 0)).reshape(K2 * K2 * c1, c2)

    # conv2 expressed directly over the (up*uq*C1)-wide conv1-output slab.
    w2big = np.zeros((up * uq * c1, flat2), np.float32)
    for pp in range(p2h):
        for qq in range(q2w):
            col = (pp * q2w + qq) * c2
            for eh in range(K2):
                for ew in range(K2):
                    k = (S2 * pp + eh) * uq + (S2 * qq + ew)
                    t = eh * K2 + ew
                    w2big[k * c1:(k + 1) * c1, col:col + c2] = \
                        w2m[t * c1:(t + 1) * c1, :]

    # linear weight: permute torch's NCHW flatten to our (p2, q2, c2) flatten
    # (the spatial swap again absorbs the transpose(1, 3)); pad A to 128 lanes.
    w3m = np.transpose(w3.reshape(a, c2, q2w, p2h), (3, 2, 1, 0)).reshape(flat2, a)
    a_pad = ((a + 127) // 128) * 128
    w3p = np.zeros((flat2, a_pad), np.float32)
    w3p[:, :a] = w3m

    bw = max(128, c1, flat2, a_pad)
    bias = np.zeros((3, bw), np.float32)
    bias[0, :c1] = b1
    bias[1, :flat2] = np.tile(b2, p2h * q2w)
    bias[2, :a] = b3

    return {"w1m": jnp.asarray(w1m, jnp.bfloat16),
            "w2big": jnp.asarray(w2big, jnp.bfloat16),
            "w3m": jnp.asarray(w3p, jnp.bfloat16),
            "bias": jnp.asarray(bias, jnp.float32)}


# ----------------------------------------------------------------------------
# Fused forward.
# ----------------------------------------------------------------------------
@functools.partial(jax.jit, static_argnames=("n_actions",))
def conv_qnet_forward(x_nhwc, prep, *, n_actions):
    """x_nhwc: (N, H, W, C*history) f32 -> (N, n_actions) f32."""
    n, h, w, cin = x_nhwc.shape
    p1h, q1w = _conv_out(h, K1, S1), _conv_out(w, K1, S1)
    p2h, q2w = _conv_out(p1h, K2, S2), _conv_out(q1w, K2, S2)
    up, uq = _used_extent(p2h), _used_extent(q2w)
    ku = up * uq
    d1 = K1 * K1 * cin
    c1 = prep["w1m"].shape[1]
    a_pad = prep["w3m"].shape[1]

    # ---- conv1 im2col (bf16, only the conv1 positions conv2 reads) ---------
    xb = x_nhwc.astype(jnp.bfloat16)
    cols = []
    for dh in range(K1):
        for dw in range(K1):
            cols.append(xb[:, dh:dh + S1 * up:S1, dw:dw + S1 * uq:S1, :])
    p1 = jnp.concatenate(cols, axis=-1).reshape(n, ku, d1)   # rows (p1, q1)

    # ---- batch blocking: big blocks; even block count for v7x megacore -----
    if n <= 128:
        nb = ((n + 7) // 8) * 8
    else:
        n_blocks0 = -(-n // 128)
        if n_blocks0 % 2:
            n_blocks0 += 1
        nb = ((-(-n // n_blocks0) + 7) // 8) * 8
    n_blocks = -(-n // nb)
    n_pad = n_blocks * nb
    if n_pad != n:
        p1 = jnp.pad(p1, ((0, n_pad - n), (0, 0), (0, 0)))

    # position-major rows within each block: (block, k, n_local)
    p1 = (p1.reshape(n_blocks, nb, ku, d1)
            .transpose(0, 2, 1, 3)
            .reshape(n_blocks * ku * nb, d1))

    kernel = functools.partial(_fused_qnet_kernel, nb=nb, up=up, uq=uq)
    out = pl.pallas_call(
        kernel,
        out_shape=jax.ShapeDtypeStruct((n_pad, a_pad), jnp.float32),
        grid=(n_blocks,),
        in_specs=[
            pl.BlockSpec((ku * nb, d1), lambda b: (b, 0)),          # patches
            pl.BlockSpec(prep["w1m"].shape, lambda b: (0, 0)),
            pl.BlockSpec(prep["w2big"].shape, lambda b: (0, 0)),
            pl.BlockSpec(prep["w3m"].shape, lambda b: (0, 0)),
            pl.BlockSpec(prep["bias"].shape, lambda b: (0, 0)),
        ],
        out_specs=pl.BlockSpec((nb, a_pad), lambda b: (b, 0)),
        scratch_shapes=[pltpu.VMEM((nb, ku * c1), jnp.float32)],
        compiler_params=pltpu.CompilerParams(
            dimension_semantics=("parallel",),
            vmem_limit_bytes=32 * 1024 * 1024),
    )(p1, prep["w1m"], prep["w2big"], prep["w3m"], prep["bias"])
    return out[:n, :n_actions]


# ----------------------------------------------------------------------------
# Pure-JAX reference (torch semantics: transpose(1, 3) + NCHW convs), f32.
# ----------------------------------------------------------------------------
def conv_qnet_reference(x_nhwc, params):
    w1, b1, w2, b2, w3, b3 = (params[k] for k in ("w1", "b1", "w2", "b2", "w3", "b3"))
    n = x_nhwc.shape[0]
    x = jnp.transpose(x_nhwc, (0, 3, 2, 1))
    dn = ("NCHW", "OIHW", "NCHW")
    y1 = jax.lax.conv_general_dilated(x, w1, (S1, S1), "VALID", dimension_numbers=dn)
    y1 = jnp.maximum(y1 + b1[None, :, None, None], 0.0)
    y2 = jax.lax.conv_general_dilated(y1, w2, (S2, S2), "VALID", dimension_numbers=dn)
    y2 = jnp.maximum(y2 + b2[None, :, None, None], 0.0)
    return y2.reshape(n, -1) @ w3.T + b3[None, :]


if __name__ == "__main__":
    # env.observation_space.shape = (H=32, W=32, C=4), state_history=1, 4 actions.
    N, H, W, C = 2, 32, 32, 4
    HIST = 1
    CIN = C * HIST
    N_ACTIONS = 4

    H1 = _conv_out(H, K1, S1)           # 7
    W1 = _conv_out(W, K1, S1)           # 7
    H2 = _conv_out(H1, K2, S2)          # 2
    W2 = _conv_out(W1, K2, S2)          # 2
    FLAT = H2 * W2 * C2                 # 128

    key = jax.random.PRNGKey(0)
    k_x, k1, k2, k3, k4, k5, k6 = jax.random.split(key, 7)

    x = jax.random.normal(k_x, (N, H, W, CIN), dtype=jnp.float32)
    params = {
        "w1": 0.05 * jax.random.normal(k1, (C1, CIN, K1, K1), dtype=jnp.float32),
        "b1": 0.05 * jax.random.normal(k2, (C1,), dtype=jnp.float32),
        "w2": 0.05 * jax.random.normal(k3, (C2, C1, K2, K2), dtype=jnp.float32),
        "b2": 0.05 * jax.random.normal(k4, (C2,), dtype=jnp.float32),
        "w3": 0.05 * jax.random.normal(k5, (N_ACTIONS, FLAT), dtype=jnp.float32),
        "b3": 0.05 * jax.random.normal(k6, (N_ACTIONS,), dtype=jnp.float32),
    }

    prep = prepare_params(params, (H, W))     # one-time weight re-layout (bf16)

    out = jax.block_until_ready(conv_qnet_forward(x, prep, n_actions=N_ACTIONS))
    assert out.shape == (N, N_ACTIONS), out.shape

    ref = jax.block_until_ready(conv_qnet_reference(x, params))
    max_err = float(jnp.max(jnp.abs(out - ref)))
    # bf16 MXU operands across three chained layers -> loosened tolerance.
    assert jnp.allclose(out, ref, rtol=5e-2, atol=1e-1), (max_err, out, ref)

    print("KERNEL_OK")
</pallas_src>

<mosaic_0001>
module attributes {stable_mosaic.version = 11 : i64} {
  func.func @_fused_qnet_kernel(%arg0: i32, %arg1: memref<288x256xbf16, #tpu.memory_space<vmem>>, %arg2: memref<256x16xbf16, #tpu.memory_space<vmem>>, %arg3: memref<576x128xbf16, #tpu.memory_space<vmem>>, %arg4: memref<128x128xbf16, #tpu.memory_space<vmem>>, %arg5: memref<3x128xf32, #tpu.memory_space<vmem>>, %arg6: memref<8x128xf32, #tpu.memory_space<vmem>>, %arg7: memref<8x576xf32, #tpu.memory_space<vmem>>) attributes {dimension_semantics = [#tpu.dimension_semantics<parallel>], iteration_bounds = array<i64: 1>, scalar_prefetch = 0 : i64, scratch_operands = 1 : i64, tpu.core_type = #tpu.core_type<tc>, window_params = [{transform_indices = @transform_0, window_bounds = array<i64: 288, 256>}, {pipeline_mode = #tpu.pipeline_mode<synchronous>, transform_indices = @transform_1, window_bounds = array<i64: 256, 16>}, {pipeline_mode = #tpu.pipeline_mode<synchronous>, transform_indices = @transform_2, window_bounds = array<i64: 576, 128>}, {pipeline_mode = #tpu.pipeline_mode<synchronous>, transform_indices = @transform_3, window_bounds = array<i64: 128, 128>}, {pipeline_mode = #tpu.pipeline_mode<synchronous>, transform_indices = @transform_4, window_bounds = array<i64: 3, 128>}, {transform_indices = @transform_5, window_bounds = array<i64: 8, 128>}]} {
    %c0 = arith.constant 0 : index
    %c0_0 = arith.constant 0 : index
    %0 = vector.load %arg5[%c0, %c0_0] : memref<3x128xf32, #tpu.memory_space<vmem>>, vector<1x16xf32>
    %c0_1 = arith.constant 0 : index
    %c0_2 = arith.constant 0 : index
    %1 = vector.load %arg1[%c0_1, %c0_2] : memref<288x256xbf16, #tpu.memory_space<vmem>>, vector<48x256xbf16>
    %c0_3 = arith.constant 0 : index
    %c0_4 = arith.constant 0 : index
    %2 = vector.load %arg2[%c0_3, %c0_4] : memref<256x16xbf16, #tpu.memory_space<vmem>>, vector<256x16xbf16>
    %cst = arith.constant dense<0.000000e+00> : vector<48x16xf32>
    %3 = tpu.matmul %1, %2, %cst {dimension_numbers = #tpu.dot_dimension_numbers<[1], [0], [0], [1], [0, 0, 1, 1], [], []>} : vector<48x256xbf16>, vector<256x16xbf16>, vector<48x16xf32> -> vector<48x16xf32>
    %4 = vector.broadcast %0 : vector<1x16xf32> to vector<48x16xf32>
    %5 = arith.addf %3, %4 : vector<48x16xf32>
    %cst_5 = arith.constant 0.000000e+00 : f32
    %6 = vector.broadcast %cst_5 : f32 to vector<48x16xf32>
    %7 = arith.maximumf %5, %6 : vector<48x16xf32>
    %8 = vector.extract_strided_slice %7 {offsets = [0, 0], sizes = [8, 16], strides = [1, 1]} : vector<48x16xf32> to vector<8x16xf32>
    %c0_6 = arith.constant 0 : index
    %c0_7 = arith.constant 0 : index
    %9 = vector.load %arg7[%c0_6, %c0_7] : memref<8x576xf32, #tpu.memory_space<vmem>>, vector<8x16xf32>
    tpu.vector_store %arg7[%c0_6, %c0_7], %8 {strides = array<i32>} : memref<8x576xf32, #tpu.memory_space<vmem>>, vector<8x16xf32>,
    %10 = vector.extract_strided_slice %7 {offsets = [8, 0], sizes = [8, 16], strides = [1, 1]} : vector<48x16xf32> to vector<8x16xf32>
    %c0_8 = arith.constant 0 : index
    %c16 = arith.constant 16 : index
    %11 = vector.load %arg7[%c0_8, %c16] : memref<8x576xf32, #tpu.memory_space<vmem>>, vector<8x16xf32>
    tpu.vector_store %arg7[%c0_8, %c16], %10 {strides = array<i32>} : memref<8x576xf32, #tpu.memory_space<vmem>>, vector<8x16xf32>,
    %12 = vector.extract_strided_slice %7 {offsets = [16, 0], sizes = [8, 16], strides = [1, 1]} : vector<48x16xf32> to vector<8x16xf32>
    %c0_9 = arith.constant 0 : index
    %c32 = arith.constant 32 : index
    %13 = vector.load %arg7[%c0_9, %c32] : memref<8x576xf32, #tpu.memory_space<vmem>>, vector<8x16xf32>
    tpu.vector_store %arg7[%c0_9, %c32], %12 {strides = array<i32>} : memref<8x576xf32, #tpu.memory_space<vmem>>, vector<8x16xf32>,
    %14 = vector.extract_strided_slice %7 {offsets = [24, 0], sizes = [8, 16], strides = [1, 1]} : vector<48x16xf32> to vector<8x16xf32>
    %c0_10 = arith.constant 0 : index
    %c48 = arith.constant 48 : index
    %15 = vector.load %arg7[%c0_10, %c48] : memref<8x576xf32, #tpu.memory_space<vmem>>, vector<8x16xf32>
    tpu.vector_store %arg7[%c0_10, %c48], %14 {strides = array<i32>} : memref<8x576xf32, #tpu.memory_space<vmem>>, vector<8x16xf32>,
    %16 = vector.extract_strided_slice %7 {offsets = [32, 0], sizes = [8, 16], strides = [1, 1]} : vector<48x16xf32> to vector<8x16xf32>
    %c0_11 = arith.constant 0 : index
    %c64 = arith.constant 64 : index
    %17 = vector.load %arg7[%c0_11, %c64] : memref<8x576xf32, #tpu.memory_space<vmem>>, vector<8x16xf32>
    tpu.vector_store %arg7[%c0_11, %c64], %16 {strides = array<i32>} : memref<8x576xf32, #tpu.memory_space<vmem>>, vector<8x16xf32>,
    %18 = vector.extract_strided_slice %7 {offsets = [40, 0], sizes = [8, 16], strides = [1, 1]} : vector<48x16xf32> to vector<8x16xf32>
    %c0_12 = arith.constant 0 : index
    %c80 = arith.constant 80 : index
    %19 = vector.load %arg7[%c0_12, %c80] : memref<8x576xf32, #tpu.memory_space<vmem>>, vector<8x16xf32>
    tpu.vector_store %arg7[%c0_12, %c80], %18 {strides = array<i32>} : memref<8x576xf32, #tpu.memory_space<vmem>>, vector<8x16xf32>,
    %c48_13 = arith.constant 48 : index
    %c0_14 = arith.constant 0 : index
    %20 = vector.load %arg1[%c48_13, %c0_14] : memref<288x256xbf16, #tpu.memory_space<vmem>>, vector<48x256xbf16>
    %c0_15 = arith.constant 0 : index
    %c0_16 = arith.constant 0 : index
    %21 = vector.load %arg2[%c0_15, %c0_16] : memref<256x16xbf16, #tpu.memory_space<vmem>>, vector<256x16xbf16>
    %cst_17 = arith.constant dense<0.000000e+00> : vector<48x16xf32>
    %22 = tpu.matmul %20, %21, %cst_17 {dimension_numbers = #tpu.dot_dimension_numbers<[1], [0], [0], [1], [0, 0, 1, 1], [], []>} : vector<48x256xbf16>, vector<256x16xbf16>, vector<48x16xf32> -> vector<48x16xf32>
    %23 = vector.broadcast %0 : vector<1x16xf32> to vector<48x16xf32>
    %24 = arith.addf %22, %23 : vector<48x16xf32>
    %cst_18 = arith.constant 0.000000e+00 : f32
    %25 = vector.broadcast %cst_18 : f32 to vector<48x16xf32>
    %26 = arith.maximumf %24, %25 : vector<48x16xf32>
    %27 = vector.extract_strided_slice %26 {offsets = [0, 0], sizes = [8, 16], strides = [1, 1]} : vector<48x16xf32> to vector<8x16xf32>
    %c0_19 = arith.constant 0 : index
    %c96 = arith.constant 96 : index
    %28 = vector.load %arg7[%c0_19, %c96] : memref<8x576xf32, #tpu.memory_space<vmem>>, vector<8x16xf32>
    tpu.vector_store %arg7[%c0_19, %c96], %27 {strides = array<i32>} : memref<8x576xf32, #tpu.memory_space<vmem>>, vector<8x16xf32>,
    %29 = vector.extract_strided_slice %26 {offsets = [8, 0], sizes = [8, 16], strides = [1, 1]} : vector<48x16xf32> to vector<8x16xf32>
    %c0_20 = arith.constant 0 : index
    %c112 = arith.constant 112 : index
    %30 = vector.load %arg7[%c0_20, %c112] : memref<8x576xf32, #tpu.memory_space<vmem>>, vector<8x16xf32>
    tpu.vector_store %arg7[%c0_20, %c112], %29 {strides = array<i32>} : memref<8x576xf32, #tpu.memory_space<vmem>>, vector<8x16xf32>,
    %31 = vector.extract_strided_slice %26 {offsets = [16, 0], sizes = [8, 16], strides = [1, 1]} : vector<48x16xf32> to vector<8x16xf32>
    %c0_21 = arith.constant 0 : index
    %c128 = arith.constant 128 : index
    %32 = vector.load %arg7[%c0_21, %c128] : memref<8x576xf32, #tpu.memory_space<vmem>>, vector<8x16xf32>
    tpu.vector_store %arg7[%c0_21, %c128], %31 {strides = array<i32>} : memref<8x576xf32, #tpu.memory_space<vmem>>, vector<8x16xf32>,
    %33 = vector.extract_strided_slice %26 {offsets = [24, 0], sizes = [8, 16], strides = [1, 1]} : vector<48x16xf32> to vector<8x16xf32>
    %c0_22 = arith.constant 0 : index
    %c144 = arith.constant 144 : index
    %34 = vector.load %arg7[%c0_22, %c144] : memref<8x576xf32, #tpu.memory_space<vmem>>, vector<8x16xf32>
    tpu.vector_store %arg7[%c0_22, %c144], %33 {strides = array<i32>} : memref<8x576xf32, #tpu.memory_space<vmem>>, vector<8x16xf32>,
    %35 = vector.extract_strided_slice %26 {offsets = [32, 0], sizes = [8, 16], strides = [1, 1]} : vector<48x16xf32> to vector<8x16xf32>
    %c0_23 = arith.constant 0 : index
    %c160 = arith.constant 160 : index
    %36 = vector.load %arg7[%c0_23, %c160] : memref<8x576xf32, #tpu.memory_space<vmem>>, vector<8x16xf32>
    tpu.vector_store %arg7[%c0_23, %c160], %35 {strides = array<i32>} : memref<8x576xf32, #tpu.memory_space<vmem>>, vector<8x16xf32>,
    %37 = vector.extract_strided_slice %26 {offsets = [40, 0], sizes = [8, 16], strides = [1, 1]} : vector<48x16xf32> to vector<8x16xf32>
    %c0_24 = arith.constant 0 : index
    %c176 = arith.constant 176 : index
    %38 = vector.load %arg7[%c0_24, %c176] : memref<8x576xf32, #tpu.memory_space<vmem>>, vector<8x16xf32>
    tpu.vector_store %arg7[%c0_24, %c176], %37 {strides = array<i32>} : memref<8x576xf32, #tpu.memory_space<vmem>>, vector<8x16xf32>,
    %c96_25 = arith.constant 96 : index
    %c0_26 = arith.constant 0 : index
    %39 = vector.load %arg1[%c96_25, %c0_26] : memref<288x256xbf16, #tpu.memory_space<vmem>>, vector<48x256xbf16>
    %c0_27 = arith.constant 0 : index
    %c0_28 = arith.constant 0 : index
    %40 = vector.load %arg2[%c0_27, %c0_28] : memref<256x16xbf16, #tpu.memory_space<vmem>>, vector<256x16xbf16>
    %cst_29 = arith.constant dense<0.000000e+00> : vector<48x16xf32>
    %41 = tpu.matmul %39, %40, %cst_29 {dimension_numbers = #tpu.dot_dimension_numbers<[1], [0], [0], [1], [0, 0, 1, 1], [], []>} : vector<48x256xbf16>, vector<256x16xbf16>, vector<48x16xf32> -> vector<48x16xf32>
    %42 = vector.broadcast %0 : vector<1x16xf32> to vector<48x16xf32>
    %43 = arith.addf %41, %42 : vector<48x16xf32>
    %cst_30 = arith.constant 0.000000e+00 : f32
    %44 = vector.broadcast %cst_30 : f32 to vector<48x16xf32>
    %45 = arith.maximumf %43, %44 : vector<48x16xf32>
    %46 = vector.extract_strided_slice %45 {offsets = [0, 0], sizes = [8, 16], strides = [1, 1]} : vector<48x16xf32> to vector<8x16xf32>
    %c0_31 = arith.constant 0 : index
    %c192 = arith.constant 192 : index
    %47 = vector.load %arg7[%c0_31, %c192] : memref<8x576xf32, #tpu.memory_space<vmem>>, vector<8x16xf32>
    tpu.vector_store %arg7[%c0_31, %c192], %46 {strides = array<i32>} : memref<8x576xf32, #tpu.memory_space<vmem>>, vector<8x16xf32>,
    %48 = vector.extract_strided_slice %45 {offsets = [8, 0], sizes = [8, 16], strides = [1, 1]} : vector<48x16xf32> to vector<8x16xf32>
    %c0_32 = arith.constant 0 : index
    %c208 = arith.constant 208 : index
    %49 = vector.load %arg7[%c0_32, %c208] : memref<8x576xf32, #tpu.memory_space<vmem>>, vector<8x16xf32>
    tpu.vector_store %arg7[%c0_32, %c208], %48 {strides = array<i32>} : memref<8x576xf32, #tpu.memory_space<vmem>>, vector<8x16xf32>,
    %50 = vector.extract_strided_slice %45 {offsets = [16, 0], sizes = [8, 16], strides = [1, 1]} : vector<48x16xf32> to vector<8x16xf32>
    %c0_33 = arith.constant 0 : index
    %c224 = arith.constant 224 : index
    %51 = vector.load %arg7[%c0_33, %c224] : memref<8x576xf32, #tpu.memory_space<vmem>>, vector<8x16xf32>
    tpu.vector_store %arg7[%c0_33, %c224], %50 {strides = array<i32>} : memref<8x576xf32, #tpu.memory_space<vmem>>, vector<8x16xf32>,
    %52 = vector.extract_strided_slice %45 {offsets = [24, 0], sizes = [8, 16], strides = [1, 1]} : vector<48x16xf32> to vector<8x16xf32>
    %c0_34 = arith.constant 0 : index
    %c240 = arith.constant 240 : index
    %53 = vector.load %arg7[%c0_34, %c240] : memref<8x576xf32, #tpu.memory_space<vmem>>, vector<8x16xf32>
    tpu.vector_store %arg7[%c0_34, %c240], %52 {strides = array<i32>} : memref<8x576xf32, #tpu.memory_space<vmem>>, vector<8x16xf32>,
    %54 = vector.extract_strided_slice %45 {offsets = [32, 0], sizes = [8, 16], strides = [1, 1]} : vector<48x16xf32> to vector<8x16xf32>
    %c0_35 = arith.constant 0 : index
    %c256 = arith.constant 256 : index
    %55 = vector.load %arg7[%c0_35, %c256] : memref<8x576xf32, #tpu.memory_space<vmem>>, vector<8x16xf32>
    tpu.vector_store %arg7[%c0_35, %c256], %54 {strides = array<i32>} : memref<8x576xf32, #tpu.memory_space<vmem>>, vector<8x16xf32>,
    %56 = vector.extract_strided_slice %45 {offsets = [40, 0], sizes = [8, 16], strides = [1, 1]} : vector<48x16xf32> to vector<8x16xf32>
    %c0_36 = arith.constant 0 : index
    %c272 = arith.constant 272 : index
    %57 = vector.load %arg7[%c0_36, %c272] : memref<8x576xf32, #tpu.memory_space<vmem>>, vector<8x16xf32>
    tpu.vector_store %arg7[%c0_36, %c272], %56 {strides = array<i32>} : memref<8x576xf32, #tpu.memory_space<vmem>>, vector<8x16xf32>,
    %c144_37 = arith.constant 144 : index
    %c0_38 = arith.constant 0 : index
    %58 = vector.load %arg1[%c144_37, %c0_38] : memref<288x256xbf16, #tpu.memory_space<vmem>>, vector<48x256xbf16>
    %c0_39 = arith.constant 0 : index
    %c0_40 = arith.constant 0 : index
    %59 = vector.load %arg2[%c0_39, %c0_40] : memref<256x16xbf16, #tpu.memory_space<vmem>>, vector<256x16xbf16>
    %cst_41 = arith.constant dense<0.000000e+00> : vector<48x16xf32>
    %60 = tpu.matmul %58, %59, %cst_41 {dimension_numbers = #tpu.dot_dimension_numbers<[1], [0], [0], [1], [0, 0, 1, 1], [], []>} : vector<48x256xbf16>, vector<256x16xbf16>, vector<48x16xf32> -> vector<48x16xf32>
    %61 = vector.broadcast %0 : vector<1x16xf32> to vector<48x16xf32>
    %62 = arith.addf %60, %61 : vector<48x16xf32>
    %cst_42 = arith.constant 0.000000e+00 : f32
    %63 = vector.broadcast %cst_42 : f32 to vector<48x16xf32>
    %64 = arith.maximumf %62, %63 : vector<48x16xf32>
    %65 = vector.extract_strided_slice %64 {offsets = [0, 0], sizes = [8, 16], strides = [1, 1]} : vector<48x16xf32> to vector<8x16xf32>
    %c0_43 = arith.constant 0 : index
    %c288 = arith.constant 288 : index
    %66 = vector.load %arg7[%c0_43, %c288] : memref<8x576xf32, #tpu.memory_space<vmem>>, vector<8x16xf32>
    tpu.vector_store %arg7[%c0_43, %c288], %65 {strides = array<i32>} : memref<8x576xf32, #tpu.memory_space<vmem>>, vector<8x16xf32>,
    %67 = vector.extract_strided_slice %64 {offsets = [8, 0], sizes = [8, 16], strides = [1, 1]} : vector<48x16xf32> to vector<8x16xf32>
    %c0_44 = arith.constant 0 : index
    %c304 = arith.constant 304 : index
    %68 = vector.load %arg7[%c0_44, %c304] : memref<8x576xf32, #tpu.memory_space<vmem>>, vector<8x16xf32>
    tpu.vector_store %arg7[%c0_44, %c304], %67 {strides = array<i32>} : memref<8x576xf32, #tpu.memory_space<vmem>>, vector<8x16xf32>,
    %69 = vector.extract_strided_slice %64 {offsets = [16, 0], sizes = [8, 16], strides = [1, 1]} : vector<48x16xf32> to vector<8x16xf32>
    %c0_45 = arith.constant 0 : index
    %c320 = arith.constant 320 : index
    %70 = vector.load %arg7[%c0_45, %c320] : memref<8x576xf32, #tpu.memory_space<vmem>>, vector<8x16xf32>
    tpu.vector_store %arg7[%c0_45, %c320], %69 {strides = array<i32>} : memref<8x576xf32, #tpu.memory_space<vmem>>, vector<8x16xf32>,
    %71 = vector.extract_strided_slice %64 {offsets = [24, 0], sizes = [8, 16], strides = [1, 1]} : vector<48x16xf32> to vector<8x16xf32>
    %c0_46 = arith.constant 0 : index
    %c336 = arith.constant 336 : index
    %72 = vector.load %arg7[%c0_46, %c336] : memref<8x576xf32, #tpu.memory_space<vmem>>, vector<8x16xf32>
    tpu.vector_store %arg7[%c0_46, %c336], %71 {strides = array<i32>} : memref<8x576xf32, #tpu.memory_space<vmem>>, vector<8x16xf32>,
    %73 = vector.extract_strided_slice %64 {offsets = [32, 0], sizes = [8, 16], strides = [1, 1]} : vector<48x16xf32> to vector<8x16xf32>
    %c0_47 = arith.constant 0 : index
    %c352 = arith.constant 352 : index
    %74 = vector.load %arg7[%c0_47, %c352] : memref<8x576xf32, #tpu.memory_space<vmem>>, vector<8x16xf32>
    tpu.vector_store %arg7[%c0_47, %c352], %73 {strides = array<i32>} : memref<8x576xf32, #tpu.memory_space<vmem>>, vector<8x16xf32>,
    %75 = vector.extract_strided_slice %64 {offsets = [40, 0], sizes = [8, 16], strides = [1, 1]} : vector<48x16xf32> to vector<8x16xf32>
    %c0_48 = arith.constant 0 : index
    %c368 = arith.constant 368 : index
    %76 = vector.load %arg7[%c0_48, %c368] : memref<8x576xf32, #tpu.memory_space<vmem>>, vector<8x16xf32>
    tpu.vector_store %arg7[%c0_48, %c368], %75 {strides = array<i32>} : memref<8x576xf32, #tpu.memory_space<vmem>>, vector<8x16xf32>,
    %c192_49 = arith.constant 192 : index
    %c0_50 = arith.constant 0 : index
    %77 = vector.load %arg1[%c192_49, %c0_50] : memref<288x256xbf16, #tpu.memory_space<vmem>>, vector<48x256xbf16>
    %c0_51 = arith.constant 0 : index
    %c0_52 = arith.constant 0 : index
    %78 = vector.load %arg2[%c0_51, %c0_52] : memref<256x16xbf16, #tpu.memory_space<vmem>>, vector<256x16xbf16>
    %cst_53 = arith.constant dense<0.000000e+00> : vector<48x16xf32>
    %79 = tpu.matmul %77, %78, %cst_53 {dimension_numbers = #tpu.dot_dimension_numbers<[1], [0], [0], [1], [0, 0, 1, 1], [], []>} : vector<48x256xbf16>, vector<256x16xbf16>, vector<48x16xf32> -> vector<48x16xf32>
    %80 = vector.broadcast %0 : vector<1x16xf32> to vector<48x16xf32>
    %81 = arith.addf %79, %80 : vector<48x16xf32>
    %cst_54 = arith.constant 0.000000e+00 : f32
    %82 = vector.broadcast %cst_54 : f32 to vector<48x16xf32>
    %83 = arith.maximumf %81, %82 : vector<48x16xf32>
    %84 = vector.extract_strided_slice %83 {offsets = [0, 0], sizes = [8, 16], strides = [1, 1]} : vector<48x16xf32> to vector<8x16xf32>
    %c0_55 = arith.constant 0 : index
    %c384 = arith.constant 384 : index
    %85 = vector.load %arg7[%c0_55, %c384] : memref<8x576xf32, #tpu.memory_space<vmem>>, vector<8x16xf32>
    tpu.vector_store %arg7[%c0_55, %c384], %84 {strides = array<i32>} : memref<8x576xf32, #tpu.memory_space<vmem>>, vector<8x16xf32>,
    %86 = vector.extract_strided_slice %83 {offsets = [8, 0], sizes = [8, 16], strides = [1, 1]} : vector<48x16xf32> to vector<8x16xf32>
    %c0_56 = arith.constant 0 : index
    %c400 = arith.constant 400 : index
    %87 = vector.load %arg7[%c0_56, %c400] : memref<8x576xf32, #tpu.memory_space<vmem>>, vector<8x16xf32>
    tpu.vector_store %arg7[%c0_56, %c400], %86 {strides = array<i32>} : memref<8x576xf32, #tpu.memory_space<vmem>>, vector<8x16xf32>,
    %88 = vector.extract_strided_slice %83 {offsets = [16, 0], sizes = [8, 16], strides = [1, 1]} : vector<48x16xf32> to vector<8x16xf32>
    %c0_57 = arith.constant 0 : index
    %c416 = arith.constant 416 : index
    %89 = vector.load %arg7[%c0_57, %c416] : memref<8x576xf32, #tpu.memory_space<vmem>>, vector<8x16xf32>
    tpu.vector_store %arg7[%c0_57, %c416], %88 {strides = array<i32>} : memref<8x576xf32, #tpu.memory_space<vmem>>, vector<8x16xf32>,
    %90 = vector.extract_strided_slice %83 {offsets = [24, 0], sizes = [8, 16], strides = [1, 1]} : vector<48x16xf32> to vector<8x16xf32>
    %c0_58 = arith.constant 0 : index
    %c432 = arith.constant 432 : index
    %91 = vector.load %arg7[%c0_58, %c432] : memref<8x576xf32, #tpu.memory_space<vmem>>, vector<8x16xf32>
    tpu.vector_store %arg7[%c0_58, %c432], %90 {strides = array<i32>} : memref<8x576xf32, #tpu.memory_space<vmem>>, vector<8x16xf32>,
    %92 = vector.extract_strided_slice %83 {offsets = [32, 0], sizes = [8, 16], strides = [1, 1]} : vector<48x16xf32> to vector<8x16xf32>
    %c0_59 = arith.constant 0 : index
    %c448 = arith.constant 448 : index
    %93 = vector.load %arg7[%c0_59, %c448] : memref<8x576xf32, #tpu.memory_space<vmem>>, vector<8x16xf32>
    tpu.vector_store %arg7[%c0_59, %c448], %92 {strides = array<i32>} : memref<8x576xf32, #tpu.memory_space<vmem>>, vector<8x16xf32>,
    %94 = vector.extract_strided_slice %83 {offsets = [40, 0], sizes = [8, 16], strides = [1, 1]} : vector<48x16xf32> to vector<8x16xf32>
    %c0_60 = arith.constant 0 : index
    %c464 = arith.constant 464 : index
    %95 = vector.load %arg7[%c0_60, %c464] : memref<8x576xf32, #tpu.memory_space<vmem>>, vector<8x16xf32>
    tpu.vector_store %arg7[%c0_60, %c464], %94 {strides = array<i32>} : memref<8x576xf32, #tpu.memory_space<vmem>>, vector<8x16xf32>,
    %c240_61 = arith.constant 240 : index
    %c0_62 = arith.constant 0 : index
    %96 = vector.load %arg1[%c240_61, %c0_62] : memref<288x256xbf16, #tpu.memory_space<vmem>>, vector<48x256xbf16>
    %c0_63 = arith.constant 0 : index
    %c0_64 = arith.constant 0 : index
    %97 = vector.load %arg2[%c0_63, %c0_64] : memref<256x16xbf16, #tpu.memory_space<vmem>>, vector<256x16xbf16>
    %cst_65 = arith.constant dense<0.000000e+00> : vector<48x16xf32>
    %98 = tpu.matmul %96, %97, %cst_65 {dimension_numbers = #tpu.dot_dimension_numbers<[1], [0], [0], [1], [0, 0, 1, 1], [], []>} : vector<48x256xbf16>, vector<256x16xbf16>, vector<48x16xf32> -> vector<48x16xf32>
    %99 = vector.broadcast %0 : vector<1x16xf32> to vector<48x16xf32>
    %100 = arith.addf %98, %99 : vector<48x16xf32>
    %cst_66 = arith.constant 0.000000e+00 : f32
    %101 = vector.broadcast %cst_66 : f32 to vector<48x16xf32>
    %102 = arith.maximumf %100, %101 : vector<48x16xf32>
    %103 = vector.extract_strided_slice %102 {offsets = [0, 0], sizes = [8, 16], strides = [1, 1]} : vector<48x16xf32> to vector<8x16xf32>
    %c0_67 = arith.constant 0 : index
    %c480 = arith.constant 480 : index
    %104 = vector.load %arg7[%c0_67, %c480] : memref<8x576xf32, #tpu.memory_space<vmem>>, vector<8x16xf32>
    tpu.vector_store %arg7[%c0_67, %c480], %103 {strides = array<i32>} : memref<8x576xf32, #tpu.memory_space<vmem>>, vector<8x16xf32>,
    %105 = vector.extract_strided_slice %102 {offsets = [8, 0], sizes = [8, 16], strides = [1, 1]} : vector<48x16xf32> to vector<8x16xf32>
    %c0_68 = arith.constant 0 : index
    %c496 = arith.constant 496 : index
    %106 = vector.load %arg7[%c0_68, %c496] : memref<8x576xf32, #tpu.memory_space<vmem>>, vector<8x16xf32>
    tpu.vector_store %arg7[%c0_68, %c496], %105 {strides = array<i32>} : memref<8x576xf32, #tpu.memory_space<vmem>>, vector<8x16xf32>,
    %107 = vector.extract_strided_slice %102 {offsets = [16, 0], sizes = [8, 16], strides = [1, 1]} : vector<48x16xf32> to vector<8x16xf32>
    %c0_69 = arith.constant 0 : index
    %c512 = arith.constant 512 : index
    %108 = vector.load %arg7[%c0_69, %c512] : memref<8x576xf32, #tpu.memory_space<vmem>>, vector<8x16xf32>
    tpu.vector_store %arg7[%c0_69, %c512], %107 {strides = array<i32>} : memref<8x576xf32, #tpu.memory_space<vmem>>, vector<8x16xf32>,
    %109 = vector.extract_strided_slice %102 {offsets = [24, 0], sizes = [8, 16], strides = [1, 1]} : vector<48x16xf32> to vector<8x16xf32>
    %c0_70 = arith.constant 0 : index
    %c528 = arith.constant 528 : index
    %110 = vector.load %arg7[%c0_70, %c528] : memref<8x576xf32, #tpu.memory_space<vmem>>, vector<8x16xf32>
    tpu.vector_store %arg7[%c0_70, %c528], %109 {strides = array<i32>} : memref<8x576xf32, #tpu.memory_space<vmem>>, vector<8x16xf32>,
    %111 = vector.extract_strided_slice %102 {offsets = [32, 0], sizes = [8, 16], strides = [1, 1]} : vector<48x16xf32> to vector<8x16xf32>
    %c0_71 = arith.constant 0 : index
    %c544 = arith.constant 544 : index
    %112 = vector.load %arg7[%c0_71, %c544] : memref<8x576xf32, #tpu.memory_space<vmem>>, vector<8x16xf32>
    tpu.vector_store %arg7[%c0_71, %c544], %111 {strides = array<i32>} : memref<8x576xf32, #tpu.memory_space<vmem>>, vector<8x16xf32>,
    %113 = vector.extract_strided_slice %102 {offsets = [40, 0], sizes = [8, 16], strides = [1, 1]} : vector<48x16xf32> to vector<8x16xf32>
    %c0_72 = arith.constant 0 : index
    %c560 = arith.constant 560 : index
    %114 = vector.load %arg7[%c0_72, %c560] : memref<8x576xf32, #tpu.memory_space<vmem>>, vector<8x16xf32>
    tpu.vector_store %arg7[%c0_72, %c560], %113 {strides = array<i32>} : memref<8x576xf32, #tpu.memory_space<vmem>>, vector<8x16xf32>,
    %c0_73 = arith.constant 0 : index
    %c0_74 = arith.constant 0 : index
    %115 = vector.load %arg7[%c0_73, %c0_74] : memref<8x576xf32, #tpu.memory_space<vmem>>, vector<8x576xf32>
    %116 = arith.truncf %115 : vector<8x576xf32> to vector<8x576xbf16>
    %c0_75 = arith.constant 0 : index
    %c0_76 = arith.constant 0 : index
    %117 = vector.load %arg3[%c0_75, %c0_76] : memref<576x128xbf16, #tpu.memory_space<vmem>>, vector<576x128xbf16>
    %cst_77 = arith.constant dense<0.000000e+00> : vector<8x128xf32>
    %118 = tpu.matmul %116, %117, %cst_77 {dimension_numbers = #tpu.dot_dimension_numbers<[1], [0], [0], [1], [0, 0, 1, 1], [], []>} : vector<8x576xbf16>, vector<576x128xbf16>, vector<8x128xf32> -> vector<8x128xf32>
    %c1 = arith.constant 1 : index
    %c0_78 = arith.constant 0 : index
    %119 = vector.load %arg5[%c1, %c0_78] : memref<3x128xf32, #tpu.memory_space<vmem>>, vector<1x128xf32>
    %120 = vector.broadcast %119 : vector<1x128xf32> to vector<8x128xf32>
    %121 = arith.addf %118, %120 : vector<8x128xf32>
    %cst_79 = arith.constant 0.000000e+00 : f32
    %122 = vector.broadcast %cst_79 : f32 to vector<8x128xf32>
    %123 = arith.maximumf %121, %122 : vector<8x128xf32>
    %124 = arith.truncf %123 : vector<8x128xf32> to vector<8x128xbf16>
    %c0_80 = arith.constant 0 : index
    %c0_81 = arith.constant 0 : index
    %125 = vector.load %arg4[%c0_80, %c0_81] : memref<128x128xbf16, #tpu.memory_space<vmem>>, vector<128x128xbf16>
    %cst_82 = arith.constant dense<0.000000e+00> : vector<8x128xf32>
    %126 = tpu.matmul %124, %125, %cst_82 {dimension_numbers = #tpu.dot_dimension_numbers<[1], [0], [0], [1], [0, 0, 1, 1], [], []>} : vector<8x128xbf16>, vector<128x128xbf16>, vector<8x128xf32> -> vector<8x128xf32>
    %c2 = arith.constant 2 : index
    %c0_83 = arith.constant 0 : index
    %127 = vector.load %arg5[%c2, %c0_83] : memref<3x128xf32, #tpu.memory_space<vmem>>, vector<1x128xf32>
    %128 = vector.broadcast %127 : vector<1x128xf32> to vector<8x128xf32>
    %129 = arith.addf %126, %128 : vector<8x128xf32>
    %c0_84 = arith.constant 0 : index
    %c0_85 = arith.constant 0 : index
    %130 = vector.load %arg6[%c0_84, %c0_85] : memref<8x128xf32, #tpu.memory_space<vmem>>, vector<8x128xf32>
    tpu.vector_store %arg6[%c0_84, %c0_85], %129 {strides = array<i32>} : memref<8x128xf32, #tpu.memory_space<vmem>>, vector<8x128xf32>,
    return
  }
  func.func @transform_0(%arg0: i32) -> (i32, i32) {
    %c0_i32 = arith.constant 0 : i32
    %c0_i32_0 = arith.constant 0 : i32
    return %arg0, %c0_i32 : i32, i32
  }
  func.func @transform_1(%arg0: i32) -> (i32, i32) {
    %c0_i32 = arith.constant 0 : i32
    %c0_i32_0 = arith.constant 0 : i32
    %c0_i32_1 = arith.constant 0 : i32
    return %c0_i32, %c0_i32_0 : i32, i32
  }
  func.func @transform_2(%arg0: i32) -> (i32, i32) {
    %c0_i32 = arith.constant 0 : i32
    %c0_i32_0 = arith.constant 0 : i32
    %c0_i32_1 = arith.constant 0 : i32
    return %c0_i32, %c0_i32_0 : i32, i32
  }
  func.func @transform_3(%arg0: i32) -> (i32, i32) {
    %c0_i32 = arith.constant 0 : i32
    %c0_i32_0 = arith.constant 0 : i32
    %c0_i32_1 = arith.constant 0 : i32
    return %c0_i32, %c0_i32_0 : i32, i32
  }
  func.func @transform_4(%arg0: i32) -> (i32, i32) {
    %c0_i32 = arith.constant 0 : i32
    %c0_i32_0 = arith.constant 0 : i32
    %c0_i32_1 = arith.constant 0 : i32
    return %c0_i32, %c0_i32_0 : i32, i32
  }
  func.func @transform_5(%arg0: i32) -> (i32, i32) {
    %c0_i32 = arith.constant 0 : i32
    %c0_i32_0 = arith.constant 0 : i32
    return %arg0, %c0_i32 : i32, i32
  }
}

</mosaic_0001>

<llo_original>
// kernel: conv_qnet_forward.1
$region0: #{conv_qnet_forward.1}
  #allocation0 [shape = 'u32[]', space=smem, size = 0x4, offset = 0x4, fixed_abs, tag = 'smem constant byte address 0x4 - core index']
  #allocation1 [shape = 'u32[144,128]{1,0:T(1,128)}', space=vmem, size = 0x12000, scoped, tag = 'internal scratch']
  #allocation2 [shape = 'f32[8,576]{1,0:T(8,128)}', space=vmem, size = 0x5000, scoped, tag = 'scratch operand']
  %s0 = inlined_call_operand.vmem [shape: bf16[288,256], index: 0, kind: input, shape index: {}]
  %s1 = inlined_call_operand.vmem [shape: bf16[256,16], index: 1, kind: input, shape index: {}]
  %s2 = inlined_call_operand.vmem [shape: bf16[576,128], index: 2, kind: input, shape index: {}]
  %s3 = inlined_call_operand.vmem [shape: bf16[128,128], index: 3, kind: input, shape index: {}]
  %s4 = inlined_call_operand.vmem [shape: f32[3,128], index: 4, kind: input, shape index: {}]
  %s5 = inlined_call_operand.vmem [shape: f32[8,128], index: 5, kind: output, shape index: {}]
  %s6 = sld [smem:[#allocation0]]
  $region30: #{conv_qnet_forward.1} parent=0
    _
  %s8 = ssub.s32 1, %s6
  %s9 = scalar_select 0, %s8, %s6
  // Predicated region
  $region2: #{conv_qnet_forward.1} parent=0 // pred_check
    _
  $region3: #{conv_qnet_forward.1} parent=0 // pred_check_branch
    %11 = sbr.rel (0) target = $region5
  $region4: #{conv_qnet_forward.1} parent=0 // pred_region
    _
  $region5: #{conv_qnet_forward.1} parent=0 // pred_fallthru
    _
  // Predicated region
  $region6: #{conv_qnet_forward.1} parent=0 // pred_check
    _
  $region7: #{conv_qnet_forward.1} parent=0 // pred_check_branch
    %13 = sbr.rel (0) target = $region9
  $region8: #{conv_qnet_forward.1} parent=0 // pred_region
    _
  $region9: #{conv_qnet_forward.1} parent=0 // pred_fallthru
    _
  // Predicated region
  $region10: #{conv_qnet_forward.1} parent=0 // pred_check
    _
  $region11: #{conv_qnet_forward.1} parent=0 // pred_check_branch
    %15 = sbr.rel (0) target = $region13
  $region12: #{conv_qnet_forward.1} parent=0 // pred_region
    _
  $region13: #{conv_qnet_forward.1} parent=0 // pred_fallthru
    _
  // Predicated region
  $region14: #{conv_qnet_forward.1} parent=0 // pred_check
    _
  $region15: #{conv_qnet_forward.1} parent=0 // pred_check_branch
    %17 = sbr.rel (0) target = $region17
  $region16: #{conv_qnet_forward.1} parent=0 // pred_region
    _
  $region17: #{conv_qnet_forward.1} parent=0 // pred_fallthru
    _
  // Predicated region
  $region18: #{conv_qnet_forward.1} parent=0 // pred_check
    _
  $region19: #{conv_qnet_forward.1} parent=0 // pred_check_branch
    %19 = sbr.rel (0) target = $region21
  $region20: #{conv_qnet_forward.1} parent=0 // pred_region
    _
  $region21: #{conv_qnet_forward.1} parent=0 // pred_fallthru
    _
  %v21 = vld [vmem:[%s4] sm:$0x1]
  %v22 = vld [vmem:[%s0] sm:$0xff]
  %v23 = vld [vmem:[%s0 + $0x8] sm:$0xff]
  %v24 = vld [vmem:[%s0 + $0x10] sm:$0xff]
  %v25 = vld [vmem:[%s0 + $0x18] sm:$0xff]
  %v26 = vld [vmem:[%s0 + $0x20] sm:$0xff]
  %v27 = vld [vmem:[%s0 + $0x28] sm:$0xff]
  %v28 = vld [vmem:[%s1] sm:$0xf]
  %v29 = vld [vmem:[%s1 + $0x4] sm:$0xf]
  %v30 = vld [vmem:[%s1 + $0x8] sm:$0xf]
  %v31 = vld [vmem:[%s1 + $0xc] sm:$0xf]
  %v32 = vld [vmem:[%s1 + $0x10] sm:$0xf]
  %v33 = vld [vmem:[%s1 + $0x14] sm:$0xf]
  %v34 = vld [vmem:[%s1 + $0x18] sm:$0xf]
  %v35 = vld [vmem:[%s1 + $0x1c] sm:$0xf]
  %v36 = vld [vmem:[%s1 + $0x20] sm:$0xf]
  %v37 = vld [vmem:[%s1 + $0x24] sm:$0xf]
  %v38 = vld [vmem:[%s1 + $0x28] sm:$0xf]
  %v39 = vld [vmem:[%s1 + $0x2c] sm:$0xf]
  %v40 = vld [vmem:[%s1 + $0x30] sm:$0xf]
  %v41 = vld [vmem:[%s1 + $0x34] sm:$0xf]
  %v42 = vld [vmem:[%s1 + $0x38] sm:$0xf]
  %v43 = vld [vmem:[%s1 + $0x3c] sm:$0xf]
  %v44 = vld [vmem:[%s1 + $0x40] sm:$0xf]
  %v45 = vld [vmem:[%s1 + $0x44] sm:$0xf]
  %v46 = vld [vmem:[%s1 + $0x48] sm:$0xf]
  %v47 = vld [vmem:[%s1 + $0x4c] sm:$0xf]
  %v48 = vld [vmem:[%s1 + $0x50] sm:$0xf]
  %v49 = vld [vmem:[%s1 + $0x54] sm:$0xf]
  %v50 = vld [vmem:[%s1 + $0x58] sm:$0xf]
  %v51 = vld [vmem:[%s1 + $0x5c] sm:$0xf]
  %v52 = vld [vmem:[%s1 + $0x60] sm:$0xf]
  %v53 = vld [vmem:[%s1 + $0x64] sm:$0xf]
  %v54 = vld [vmem:[%s1 + $0x68] sm:$0xf]
  %v55 = vld [vmem:[%s1 + $0x6c] sm:$0xf]
  %v56 = vld [vmem:[%s1 + $0x70] sm:$0xf]
  %v57 = vld [vmem:[%s1 + $0x74] sm:$0xf]
  %v58 = vld [vmem:[%s1 + $0x78] sm:$0xf]
  %v59 = vld [vmem:[%s1 + $0x7c] sm:$0xf]
  %v60 = vlaneseq
  %v61 = vshrl.u32 %v60, 7
  %v62 = vsub.s32 0, %v61
  %v63 = vrot.slane %v21, %v62
  %v70 = vunpack.c.l.b16 %v22
  %v71 = vunpack.c.h.b16 %v22
  %v72 = vunpack.c.l.b16 %v23
  %v73 = vunpack.c.h.b16 %v23
  %v74 = vunpack.c.l.b16 %v24
  %v75 = vunpack.c.h.b16 %v24
  %v76 = vunpack.c.l.b16 %v25
  %v77 = vunpack.c.h.b16 %v25
  %v78 = vunpack.c.l.b16 %v26
  %v79 = vunpack.c.h.b16 %v26
  %v80 = vunpack.c.l.b16 %v27
  %v81 = vunpack.c.h.b16 %v27
  %v82 = vpack.c.b16 %v72, %v70
  %v83 = vpack.c.b16 %v73, %v71
  %v84 = vpack.c.b16 %v76, %v74
  %v85 = vpack.c.b16 %v77, %v75
  %v86 = vpack.c.b16 %v80, %v78
  %v87 = vpack.c.b16 %v81, %v79
  %v126 = vunpack.c.l.b16 %v28
  %v127 = vunpack.c.l.b16 %v29
  %v128 = vunpack.c.l.b16 %v30
  %v129 = vunpack.c.l.b16 %v31
  %v130 = vunpack.c.l.b16 %v32
  %v131 = vunpack.c.l.b16 %v33
  %v132 = vunpack.c.l.b16 %v34
  %v133 = vunpack.c.l.b16 %v35
  %v134 = vunpack.c.l.b16 %v36
  %v135 = vunpack.c.l.b16 %v37
  %v136 = vunpack.c.l.b16 %v38
  %v137 = vunpack.c.l.b16 %v39
  %v138 = vunpack.c.l.b16 %v40
  %v139 = vunpack.c.l.b16 %v41
  %v140 = vunpack.c.l.b16 %v42
  %v141 = vunpack.c.l.b16 %v43
  %v142 = vunpack.c.l.b16 %v44
  %v143 = vunpack.c.l.b16 %v45
  %v144 = vunpack.c.l.b16 %v46
  %v145 = vunpack.c.l.b16 %v47
  %v146 = vunpack.c.l.b16 %v48
  %v147 = vunpack.c.l.b16 %v49
  %v148 = vunpack.c.l.b16 %v50
  %v149 = vunpack.c.l.b16 %v51
  %v150 = vunpack.c.l.b16 %v52
  %v151 = vunpack.c.l.b16 %v53
  %v152 = vunpack.c.l.b16 %v54
  %v153 = vunpack.c.l.b16 %v55
  %v154 = vunpack.c.l.b16 %v56
  %v155 = vunpack.c.l.b16 %v57
  %v156 = vunpack.c.l.b16 %v58
  %v157 = vunpack.c.l.b16 %v59
  %v158 = vpack.c.b16 %v127, %v126
  %v159 = vpack.c.b16 %v129, %v128
  %v160 = vpack.c.b16 %v131, %v130
  %v161 = vpack.c.b16 %v133, %v132
  %v162 = vpack.c.b16 %v135, %v134
  %v163 = vpack.c.b16 %v137, %v136
  %v164 = vpack.c.b16 %v139, %v138
  %v165 = vpack.c.b16 %v141, %v140
  %v166 = vpack.c.b16 %v143, %v142
  %v167 = vpack.c.b16 %v145, %v144
  %v168 = vpack.c.b16 %v147, %v146
  %v169 = vpack.c.b16 %v149, %v148
  %v170 = vpack.c.b16 %v151, %v150
  %v171 = vpack.c.b16 %v153, %v152
  %v172 = vpack.c.b16 %v155, %v154
  %v173 = vpack.c.b16 %v157, %v156
  %190 = vmatprep.subr.bf16.mxu0 0
  %191 = vmatpush1.bf16.msra.mxu0 %v158
  %192 = vmatprep.subr.bf16.mxu0 0
  %193 = vmatpush1.bf16.msra.mxu0 %v159
  %194 = vmatprep.subr.bf16.mxu0 0
  %195 = vmatpush1.bf16.msra.mxu0 %v160
  %196 = vmatprep.subr.bf16.mxu0 0
  %197 = vmatpush1.bf16.msra.mxu0 %v161
  %198 = vmatprep.subr.bf16.mxu0 0
  %199 = vmatpush1.bf16.msra.mxu0 %v162
  %200 = vmatprep.subr.bf16.mxu0 0
  %201 = vmatpush1.bf16.msra.mxu0 %v163
  %202 = vmatprep.subr.bf16.mxu0 0
  %203 = vmatpush1.bf16.msra.mxu0 %v164
  %204 = vmatprep.subr.bf16.mxu0 0
  %205 = vmatpush1.bf16.msra.mxu0 %v165
  %206 = vmatprep.subr.bf16.mxu0 0
  %207 = vmatpush1.bf16.msra.mxu0 %v166
  %208 = vmatprep.subr.bf16.mxu0 0
  %209 = vmatpush1.bf16.msra.mxu0 %v167
  %210 = vmatprep.subr.bf16.mxu0 0
  %211 = vmatpush1.bf16.msra.mxu0 %v168
  %212 = vmatprep.subr.bf16.mxu0 0
  %213 = vmatpush1.bf16.msra.mxu0 %v169
  %214 = vmatprep.subr.bf16.mxu0 0
  %215 = vmatpush1.bf16.msra.mxu0 %v170
  %216 = vmatprep.subr.bf16.mxu0 0
  %217 = vmatpush1.bf16.msra.mxu0 %v171
  %218 = vmatprep.subr.bf16.mxu0 0
  %219 = vmatpush1.bf16.msra.mxu0 %v172
  %220 = vmatprep.subr.bf16.mxu0 0
  %221 = vmatpush1.bf16.msra.mxu0 %v173
  %222 = vmatprep.mubr.bf16.mxu0 %v83
  %223 = vmatmul.mubr.bf16.gmra.mrb[0].mxu0 %v82
  %v224 = vpop.f32.mrb[0].mxu0
  %v225 = vadd.f32 %v63, %v224
  %v226 = vpop.f32.mrb[0].mxu0
  %v227 = vpop.f32.mrb[0].mxu0
  %v228 = vadd.f32 %v63, %v227
  %v229 = vpop.f32.mrb[0].mxu0
  %230 = vmatprep.mubr.bf16.mxu0 %v85
  %231 = vmatmul.mubr.bf16.gmra.mrb[0].mxu0 %v84
  %v232 = vpop.f32.mrb[0].mxu0
  %v233 = vadd.f32 %v63, %v232
  %v234 = vpop.f32.mrb[0].mxu0
  %v235 = vpop.f32.mrb[0].mxu0
  %v236 = vadd.f32 %v63, %v235
  %v237 = vpop.f32.mrb[0].mxu0
  %238 = vmatprep.mubr.bf16.mxu0 %v87
  %239 = vmatmul.mubr.bf16.gmra.mrb[0].mxu0 %v86
  %v240 = vpop.f32.mrb[0].mxu0
  %v241 = vadd.f32 %v63, %v240
  %v242 = vpop.f32.mrb[0].mxu0
  %v243 = vpop.f32.mrb[0].mxu0
  %v244 = vadd.f32 %v63, %v243
  %v245 = vpop.f32.mrb[0].mxu0
  %246 = vdwg.mxu0
  %v247 = vmax.f32 %v225, 0.0
  %v248 = vmax.f32 %v228, 0.0
  %v249 = vmax.f32 %v233, 0.0
  %v250 = vmax.f32 %v236, 0.0
  %v251 = vmax.f32 %v241, 0.0
  %v252 = vmax.f32 %v244, 0.0
  %vm253 = vcmask 130048
  %254 = vst.msk [vmem:[#allocation2] sm:$0xff] %vm253, %v247
  %256 = vrot.lane.b32.xlu0 %v248, 16
  %v257 = vpop.permute.xlu0 %256
  %vm259 = vcmask 261248
  %260 = vst.msk [vmem:[#allocation2] sm:$0xff] %vm259, %v257
  %262 = vrot.lane.b32.xlu0 %v249, 32
  %v263 = vpop.permute.xlu0 %262
  %vm265 = vcmask 392448
  %266 = vst.msk [vmem:[#allocation2] sm:$0xff] %vm265, %v263
  %268 = vrot.lane.b32.xlu0 %v250, 48
  %v269 = vpop.permute.xlu0 %268
  %vm271 = vcmask 523648
  %272 = vst.msk [vmem:[#allocation2] sm:$0xff] %vm271, %v269
  %274 = vrot.lane.b32.xlu0 %v251, 64
  %v275 = vpop.permute.xlu0 %274
  %vm277 = vcmask 654848
  %278 = vst.msk [vmem:[#allocation2] sm:$0xff] %vm277, %v275
  %280 = vrot.lane.b32.xlu0 %v252, 80
  %v281 = vpop.permute.xlu0 %280
  %vm283 = vcmask 786048
  %284 = vst.msk [vmem:[#allocation2] sm:$0xff] %vm283, %v281
  %v285 = vld [vmem:[%s0 + $0x30] sm:$0xff]
  %v286 = vld [vmem:[%s0 + $0x38] sm:$0xff]
  %v287 = vld [vmem:[%s0 + $0x40] sm:$0xff]
  %v288 = vld [vmem:[%s0 + $0x48] sm:$0xff]
  %v289 = vld [vmem:[%s0 + $0x50] sm:$0xff]
  %v290 = vld [vmem:[%s0 + $0x58] sm:$0xff]
  %v291 = vld [vmem:[%s1] sm:$0xf]
  %v292 = vld [vmem:[%s1 + $0x4] sm:$0xf]
  %v293 = vld [vmem:[%s1 + $0x8] sm:$0xf]
  %v294 = vld [vmem:[%s1 + $0xc] sm:$0xf]
  %v295 = vld [vmem:[%s1 + $0x10] sm:$0xf]
  %v296 = vld [vmem:[%s1 + $0x14] sm:$0xf]
  %v297 = vld [vmem:[%s1 + $0x18] sm:$0xf]
  %v298 = vld [vmem:[%s1 + $0x1c] sm:$0xf]
  %v299 = vld [vmem:[%s1 + $0x20] sm:$0xf]
  %v300 = vld [vmem:[%s1 + $0x24] sm:$0xf]
  %v301 = vld [vmem:[%s1 + $0x28] sm:$0xf]
  %v302 = vld [vmem:[%s1 + $0x2c] sm:$0xf]
  %v303 = vld [vmem:[%s1 + $0x30] sm:$0xf]
  %v304 = vld [vmem:[%s1 + $0x34] sm:$0xf]
  %v305 = vld [vmem:[%s1 + $0x38] sm:$0xf]
  %v306 = vld [vmem:[%s1 + $0x3c] sm:$0xf]
  %v307 = vld [vmem:[%s1 + $0x40] sm:$0xf]
  %v308 = vld [vmem:[%s1 + $0x44] sm:$0xf]
  %v309 = vld [vmem:[%s1 + $0x48] sm:$0xf]
  %v310 = vld [vmem:[%s1 + $0x4c] sm:$0xf]
  %v311 = vld [vmem:[%s1 + $0x50] sm:$0xf]
  %v312 = vld [vmem:[%s1 + $0x54] sm:$0xf]
  %v313 = vld [vmem:[%s1 + $0x58] sm:$0xf]
  %v314 = vld [vmem:[%s1 + $0x5c] sm:$0xf]
  %v315 = vld [vmem:[%s1 + $0x60] sm:$0xf]
  %v316 = vld [vmem:[%s1 + $0x64] sm:$0xf]
  %v317 = vld [vmem:[%s1 + $0x68] sm:$0xf]
  %v318 = vld [vmem:[%s1 + $0x6c] sm:$0xf]
  %v319 = vld [vmem:[%s1 + $0x70] sm:$0xf]
  %v320 = vld [vmem:[%s1 + $0x74] sm:$0xf]
  %v321 = vld [vmem:[%s1 + $0x78] sm:$0xf]
  %v322 = vld [vmem:[%s1 + $0x7c] sm:$0xf]
  %v329 = vunpack.c.l.b16 %v285
  %v330 = vunpack.c.h.b16 %v285
  %v331 = vunpack.c.l.b16 %v286
  %v332 = vunpack.c.h.b16 %v286
  %v333 = vunpack.c.l.b16 %v287
  %v334 = vunpack.c.h.b16 %v287
  %v335 = vunpack.c.l.b16 %v288
  %v336 = vunpack.c.h.b16 %v288
  %v337 = vunpack.c.l.b16 %v289
  %v338 = vunpack.c.h.b16 %v289
  %v339 = vunpack.c.l.b16 %v290
  %v340 = vunpack.c.h.b16 %v290
  %v341 = vpack.c.b16 %v331, %v329
  %v342 = vpack.c.b16 %v332, %v330
  %v343 = vpack.c.b16 %v335, %v333
  %v344 = vpack.c.b16 %v336, %v334
  %v345 = vpack.c.b16 %v339, %v337
  %v346 = vpack.c.b16 %v340, %v338
  %v385 = vunpack.c.l.b16 %v291
  %v386 = vunpack.c.l.b16 %v292
  %v387 = vunpack.c.l.b16 %v293
  %v388 = vunpack.c.l.b16 %v294
  %v389 = vunpack.c.l.b16 %v295
  %v390 = vunpack.c.l.b16 %v296
  %v391 = vunpack.c.l.b16 %v297
  %v392 = vunpack.c.l.b16 %v298
  %v393 = vunpack.c.l.b16 %v299
  %v394 = vunpack.c.l.b16 %v300
  %v395 = vunpack.c.l.b16 %v301
  %v396 = vunpack.c.l.b16 %v302
  %v397 = vunpack.c.l.b16 %v303
  %v398 = vunpack.c.l.b16 %v304
  %v399 = vunpack.c.l.b16 %v305
  %v400 = vunpack.c.l.b16 %v306
  %v401 = vunpack.c.l.b16 %v307
  %v402 = vunpack.c.l.b16 %v308
  %v403 = vunpack.c.l.b16 %v309
  %v404 = vunpack.c.l.b16 %v310
  %v405 = vunpack.c.l.b16 %v311
  %v406 = vunpack.c.l.b16 %v312
  %v407 = vunpack.c.l.b16 %v313
  %v408 = vunpack.c.l.b16 %v314
  %v409 = vunpack.c.l.b16 %v315
  %v410 = vunpack.c.l.b16 %v316
  %v411 = vunpack.c.l.b16 %v317
  %v412 = vunpack.c.l.b16 %v318
  %v413 = vunpack.c.l.b16 %v319
  %v414 = vunpack.c.l.b16 %v320
  %v415 = vunpack.c.l.b16 %v321
  %v416 = vunpack.c.l.b16 %v322
  %v417 = vpack.c.b16 %v386, %v385
  %v418 = vpack.c.b16 %v388, %v387
  %v419 = vpack.c.b16 %v390, %v389
  %v420 = vpack.c.b16 %v392, %v391
  %v421 = vpack.c.b16 %v394, %v393
  %v422 = vpack.c.b16 %v396, %v395
  %v423 = vpack.c.b16 %v398, %v397
  %v424 = vpack.c.b16 %v400, %v399
  %v425 = vpack.c.b16 %v402, %v401
  %v426 = vpack.c.b16 %v404, %v403
  %v427 = vpack.c.b16 %v406, %v405
  %v428 = vpack.c.b16 %v408, %v407
  %v429 = vpack.c.b16 %v410, %v409
  %v430 = vpack.c.b16 %v412, %v411
  %v431 = vpack.c.b16 %v414, %v413
  %v432 = vpack.c.b16 %v416, %v415
  %449 = vmatprep.subr.bf16.mxu0 0
  %450 = vmatpush1.bf16.msra.mxu0 %v417
  %451 = vmatprep.subr.bf16.mxu0 0
  %452 = vmatpush1.bf16.msra.mxu0 %v418
  %453 = vmatprep.subr.bf16.mxu0 0
  %454 = vmatpush1.bf16.msra.mxu0 %v419
  %455 = vmatprep.subr.bf16.mxu0 0
  %456 = vmatpush1.bf16.msra.mxu0 %v420
  %457 = vmatprep.subr.bf16.mxu0 0
  %458 = vmatpush1.bf16.msra.mxu0 %v421
  %459 = vmatprep.subr.bf16.mxu0 0
  %460 = vmatpush1.bf16.msra.mxu0 %v422
  %461 = vmatprep.subr.bf16.mxu0 0
  %462 = vmatpush1.bf16.msra.mxu0 %v423
  %463 = vmatprep.subr.bf16.mxu0 0
  %464 = vmatpush1.bf16.msra.mxu0 %v424
  %465 = vmatprep.subr.bf16.mxu0 0
  %466 = vmatpush1.bf16.msra.mxu0 %v425
  %467 = vmatprep.subr.bf16.mxu0 0
  %468 = vmatpush1.bf16.msra.mxu0 %v426
  %469 = vmatprep.subr.bf16.mxu0 0
  %470 = vmatpush1.bf16.msra.mxu0 %v427
  %471 = vmatprep.subr.bf16.mxu0 0
  %472 = vmatpush1.bf16.msra.mxu0 %v428
  %473 = vmatprep.subr.bf16.mxu0 0
  %474 = vmatpush1.bf16.msra.mxu0 %v429
  %475 = vmatprep.subr.bf16.mxu0 0
  %476 = vmatpush1.bf16.msra.mxu0 %v430
  %477 = vmatprep.subr.bf16.mxu0 0
  %478 = vmatpush1.bf16.msra.mxu0 %v431
  %479 = vmatprep.subr.bf16.mxu0 0
  %480 = vmatpush1.bf16.msra.mxu0 %v432
  %481 = vmatprep.mubr.bf16.mxu0 %v342
  %482 = vmatmul.mubr.bf16.gmra.mrb[0].mxu0 %v341
  %v483 = vpop.f32.mrb[0].mxu0
  %v484 = vadd.f32 %v63, %v483
  %v485 = vpop.f32.mrb[0].mxu0
  %v486 = vpop.f32.mrb[0].mxu0
  %v487 = vadd.f32 %v63, %v486
  %v488 = vpop.f32.mrb[0].mxu0
  %489 = vmatprep.mubr.bf16.mxu0 %v344
  %490 = vmatmul.mubr.bf16.gmra.mrb[0].mxu0 %v343
  %v491 = vpop.f32.mrb[0].mxu0
  %v492 = vadd.f32 %v63, %v491
  %v493 = vpop.f32.mrb[0].mxu0
  %v494 = vpop.f32.mrb[0].mxu0
  %v495 = vadd.f32 %v63, %v494
  %v496 = vpop.f32.mrb[0].mxu0
  %497 = vmatprep.mubr.bf16.mxu0 %v346
  %498 = vmatmul.mubr.bf16.gmra.mrb[0].mxu0 %v345
  %v499 = vpop.f32.mrb[0].mxu0
  %v500 = vadd.f32 %v63, %v499
  %v501 = vpop.f32.mrb[0].mxu0
  %v502 = vpop.f32.mrb[0].mxu0
  %v503 = vadd.f32 %v63, %v502
  %v504 = vpop.f32.mrb[0].mxu0
  %505 = vdwg.mxu0
  %v506 = vmax.f32 %v484, 0.0
  %v507 = vmax.f32 %v487, 0.0
  %v508 = vmax.f32 %v492, 0.0
  %v509 = vmax.f32 %v495, 0.0
  %v510 = vmax.f32 %v500, 0.0
  %v511 = vmax.f32 %v503, 0.0
  %513 = vrot.lane.b32.xlu0 %v506, 96
  %v514 = vpop.permute.xlu0 %513
  %vm516 = vcmask 917248
  %517 = vst.msk [vmem:[#allocation2] sm:$0xff] %vm516, %v514
  %519 = vrot.lane.b32.xlu0 %v507, 112
  %v520 = vpop.permute.xlu0 %519
  %vm522 = vcmask 1048448
  %523 = vst.msk [vmem:[#allocation2] sm:$0xff] %vm522, %v520
  %524 = vst.msk [vmem:[#allocation2 + $0x8] sm:$0xff] %vm253, %v508
  %526 = vrot.lane.b32.xlu0 %v509, 16
  %v527 = vpop.permute.xlu0 %526
  %529 = vst.msk [vmem:[#allocation2 + $0x8] sm:$0xff] %vm259, %v527
  %531 = vrot.lane.b32.xlu0 %v510, 32
  %v532 = vpop.permute.xlu0 %531
  %534 = vst.msk [vmem:[#allocation2 + $0x8] sm:$0xff] %vm265, %v532
  %536 = vrot.lane.b32.xlu0 %v511, 48
  %v537 = vpop.permute.xlu0 %536
  %539 = vst.msk [vmem:[#allocation2 + $0x8] sm:$0xff] %vm271, %v537
  %v540 = vld [vmem:[%s0 + $0x60] sm:$0xff]
  %v541 = vld [vmem:[%s0 + $0x68] sm:$0xff]
  %v542 = vld [vmem:[%s0 + $0x70] sm:$0xff]
  %v543 = vld [vmem:[%s0 + $0x78] sm:$0xff]
  %v544 = vld [vmem:[%s0 + $0x80] sm:$0xff]
  %v545 = vld [vmem:[%s0 + $0x88] sm:$0xff]
  %v546 = vld [vmem:[%s1] sm:$0xf]
  %v547 = vld [vmem:[%s1 + $0x4] sm:$0xf]
  %v548 = vld [vmem:[%s1 + $0x8] sm:$0xf]
  %v549 = vld [vmem:[%s1 + $0xc] sm:$0xf]
  %v550 = vld [vmem:[%s1 + $0x10] sm:$0xf]
  %v551 = vld [vmem:[%s1 + $0x14] sm:$0xf]
  %v552 = vld [vmem:[%s1 + $0x18] sm:$0xf]
  %v553 = vld [vmem:[%s1 + $0x1c] sm:$0xf]
  %v554 = vld [vmem:[%s1 + $0x20] sm:$0xf]
  %v555 = vld [vmem:[%s1 + $0x24] sm:$0xf]
  %v556 = vld [vmem:[%s1 + $0x28] sm:$0xf]
  %v557 = vld [vmem:[%s1 + $0x2c] sm:$0xf]
  %v558 = vld [vmem:[%s1 + $0x30] sm:$0xf]
  %v559 = vld [vmem:[%s1 + $0x34] sm:$0xf]
  %v560 = vld [vmem:[%s1 + $0x38] sm:$0xf]
  %v561 = vld [vmem:[%s1 + $0x3c] sm:$0xf]
  %v562 = vld [vmem:[%s1 + $0x40] sm:$0xf]
  %v563 = vld [vmem:[%s1 + $0x44] sm:$0xf]
  %v564 = vld [vmem:[%s1 + $0x48] sm:$0xf]
  %v565 = vld [vmem:[%s1 + $0x4c] sm:$0xf]
  %v566 = vld [vmem:[%s1 + $0x50] sm:$0xf]
  %v567 = vld [vmem:[%s1 + $0x54] sm:$0xf]
  %v568 = vld [vmem:[%s1 + $0x58] sm:$0xf]
  %v569 = vld [vmem:[%s1 + $0x5c] sm:$0xf]
  %v570 = vld [vmem:[%s1 + $0x60] sm:$0xf]
  %v571 = vld [vmem:[%s1 + $0x64] sm:$0xf]
  %v572 = vld [vmem:[%s1 + $0x68] sm:$0xf]
  %v573 = vld [vmem:[%s1 + $0x6c] sm:$0xf]
  %v574 = vld [vmem:[%s1 + $0x70] sm:$0xf]
  %v575 = vld [vmem:[%s1 + $0x74] sm:$0xf]
  %v576 = vld [vmem:[%s1 + $0x78] sm:$0xf]
  %v577 = vld [vmem:[%s1 + $0x7c] sm:$0xf]
  %v584 = vunpack.c.l.b16 %v540
  %v585 = vunpack.c.h.b16 %v540
  %v586 = vunpack.c.l.b16 %v541
  %v587 = vunpack.c.h.b16 %v541
  %v588 = vunpack.c.l.b16 %v542
  %v589 = vunpack.c.h.b16 %v542
  %v590 = vunpack.c.l.b16 %v543
  %v591 = vunpack.c.h.b16 %v543
  %v592 = vunpack.c.l.b16 %v544
  %v593 = vunpack.c.h.b16 %v544
  %v594 = vunpack.c.l.b16 %v545
  %v595 = vunpack.c.h.b16 %v545
  %v596 = vpack.c.b16 %v586, %v584
  %v597 = vpack.c.b16 %v587, %v585
  %v598 = vpack.c.b16 %v590, %v588
  %v599 = vpack.c.b16 %v591, %v589
  %v600 = vpack.c.b16 %v594, %v592
  %v601 = vpack.c.b16 %v595, %v593
  %v640 = vunpack.c.l.b16 %v546
  %v641 = vunpack.c.l.b16 %v547
  %v642 = vunpack.c.l.b16 %v548
  %v643 = vunpack.c.l.b16 %v549
  %v644 = vunpack.c.l.b16 %v550
  %v645 = vunpack.c.l.b16 %v551
  %v646 = vunpack.c.l.b16 %v552
  %v647 = vunpack.c.l.b16 %v553
  %v648 = vunpack.c.l.b16 %v554
  %v649 = vunpack.c.l.b16 %v555
  %v650 = vunpack.c.l.b16 %v556
  %v651 = vunpack.c.l.b16 %v557
  %v652 = vunpack.c.l.b16 %v558
  %v653 = vunpack.c.l.b16 %v559
  %v654 = vunpack.c.l.b16 %v560
  %v655 = vunpack.c.l.b16 %v561
  %v656 = vunpack.c.l.b16 %v562
  %v657 = vunpack.c.l.b16 %v563
  %v658 = vunpack.c.l.b16 %v564
  %v659 = vunpack.c.l.b16 %v565
  %v660 = vunpack.c.l.b16 %v566
  %v661 = vunpack.c.l.b16 %v567
  %v662 = vunpack.c.l.b16 %v568
  %v663 = vunpack.c.l.b16 %v569
  %v664 = vunpack.c.l.b16 %v570
  %v665 = vunpack.c.l.b16 %v571
  %v666 = vunpack.c.l.b16 %v572
  %v667 = vunpack.c.l.b16 %v573
  %v668 = vunpack.c.l.b16 %v574
  %v669 = vunpack.c.l.b16 %v575
  %v670 = vunpack.c.l.b16 %v576
  %v671 = vunpack.c.l.b16 %v577
  %v672 = vpack.c.b16 %v641, %v640
  %v673 = vpack.c.b16 %v643, %v642
  %v674 = vpack.c.b16 %v645, %v644
  %v675 = vpack.c.b16 %v647, %v646
  %v676 = vpack.c.b16 %v649, %v648
  %v677 = vpack.c.b16 %v651, %v650
  %v678 = vpack.c.b16 %v653, %v652
  %v679 = vpack.c.b16 %v655, %v654
  %v680 = vpack.c.b16 %v657, %v656
  %v681 = vpack.c.b16 %v659, %v658
  %v682 = vpack.c.b16 %v661, %v660
  %v683 = vpack.c.b16 %v663, %v662
  %v684 = vpack.c.b16 %v665, %v664
  %v685 = vpack.c.b16 %v667, %v666
  %v686 = vpack.c.b16 %v669, %v668
  %v687 = vpack.c.b16 %v671, %v670
  %704 = vmatprep.subr.bf16.mxu0 0
  %705 = vmatpush1.bf16.msra.mxu0 %v672
  %706 = vmatprep.subr.bf16.mxu0 0
  %707 = vmatpush1.bf16.msra.mxu0 %v673
  %708 = vmatprep.subr.bf16.mxu0 0
  %709 = vmatpush1.bf16.msra.mxu0 %v674
  %710 = vmatprep.subr.bf16.mxu0 0
  %711 = vmatpush1.bf16.msra.mxu0 %v675
  %712 = vmatprep.subr.bf16.mxu0 0
  %713 = vmatpush1.bf16.msra.mxu0 %v676
  %714 = vmatprep.subr.bf16.mxu0 0
  %715 = vmatpush1.bf16.msra.mxu0 %v677
  %716 = vmatprep.subr.bf16.mxu0 0
  %717 = vmatpush1.bf16.msra.mxu0 %v678
  %718 = vmatprep.subr.bf16.mxu0 0
  %719 = vmatpush1.bf16.msra.mxu0 %v679
  %720 = vmatprep.subr.bf16.mxu0 0
  %721 = vmatpush1.bf16.msra.mxu0 %v680
  %722 = vmatprep.subr.bf16.mxu0 0
  %723 = vmatpush1.bf16.msra.mxu0 %v681
  %724 = vmatprep.subr.bf16.mxu0 0
  %725 = vmatpush1.bf16.msra.mxu0 %v682
  %726 = vmatprep.subr.bf16.mxu0 0
  %727 = vmatpush1.bf16.msra.mxu0 %v683
  %728 = vmatprep.subr.bf16.mxu0 0
  %729 = vmatpush1.bf16.msra.mxu0 %v684
  %730 = vmatprep.subr.bf16.mxu0 0
  %731 = vmatpush1.bf16.msra.mxu0 %v685
  %732 = vmatprep.subr.bf16.mxu0 0
  %733 = vmatpush1.bf16.msra.mxu0 %v686
  %734 = vmatprep.subr.bf16.mxu0 0
  %735 = vmatpush1.bf16.msra.mxu0 %v687
  %736 = vmatprep.mubr.bf16.mxu0 %v597
  %737 = vmatmul.mubr.bf16.gmra.mrb[0].mxu0 %v596
  %v738 = vpop.f32.mrb[0].mxu0
  %v739 = vadd.f32 %v63, %v738
  %v740 = vpop.f32.mrb[0].mxu0
  %v741 = vpop.f32.mrb[0].mxu0
  %v742 = vadd.f32 %v63, %v741
  %v743 = vpop.f32.mrb[0].mxu0
  %744 = vmatprep.mubr.bf16.mxu0 %v599
  %745 = vmatmul.mubr.bf16.gmra.mrb[0].mxu0 %v598
  %v746 = vpop.f32.mrb[0].mxu0
  %v747 = vadd.f32 %v63, %v746
  %v748 = vpop.f32.mrb[0].mxu0
  %v749 = vpop.f32.mrb[0].mxu0
  %v750 = vadd.f32 %v63, %v749
  %v751 = vpop.f32.mrb[0].mxu0
  %752 = vmatprep.mubr.bf16.mxu0 %v601
  %753 = vmatmul.mubr.bf16.gmra.mrb[0].mxu0 %v600
  %v754 = vpop.f32.mrb[0].mxu0
  %v755 = vadd.f32 %v63, %v754
  %v756 = vpop.f32.mrb[0].mxu0
  %v757 = vpop.f32.mrb[0].mxu0
  %v758 = vadd.f32 %v63, %v757
  %v759 = vpop.f32.mrb[0].mxu0
  %760 = vdwg.mxu0
  %v761 = vmax.f32 %v739, 0.0
  %v762 = vmax.f32 %v742, 0.0
  %v763 = vmax.f32 %v747, 0.0
  %v764 = vmax.f32 %v750, 0.0
  %v765 = vmax.f32 %v755, 0.0
  %v766 = vmax.f32 %v758, 0.0
  %768 = vrot.lane.b32.xlu0 %v761, 64
  %v769 = vpop.permute.xlu0 %768
  %771 = vst.msk [vmem:[#allocation2 + $0x8] sm:$0xff] %vm277, %v769
  %773 = vrot.lane.b32.xlu0 %v762, 80
  %v774 = vpop.permute.xlu0 %773
  %776 = vst.msk [vmem:[#allocation2 + $0x8] sm:$0xff] %vm283, %v774
  %778 = vrot.lane.b32.xlu0 %v763, 96
  %v779 = vpop.permute.xlu0 %778
  %781 = vst.msk [vmem:[#allocation2 + $0x8] sm:$0xff] %vm516, %v779
  %783 = vrot.lane.b32.xlu0 %v764, 112
  %v784 = vpop.permute.xlu0 %783
  %786 = vst.msk [vmem:[#allocation2 + $0x8] sm:$0xff] %vm522, %v784
  %787 = vst.msk [vmem:[#allocation2 + $0x10] sm:$0xff] %vm253, %v765
  %789 = vrot.lane.b32.xlu0 %v766, 16
  %v790 = vpop.permute.xlu0 %789
  %792 = vst.msk [vmem:[#allocation2 + $0x10] sm:$0xff] %vm259, %v790
  %v793 = vld [vmem:[%s0 + $0x90] sm:$0xff]
  %v794 = vld [vmem:[%s0 + $0x98] sm:$0xff]
  %v795 = vld [vmem:[%s0 + $0xa0] sm:$0xff]
  %v796 = vld [vmem:[%s0 + $0xa8] sm:$0xff]
  %v797 = vld [vmem:[%s0 + $0xb0] sm:$0xff]
  %v798 = vld [vmem:[%s0 + $0xb8] sm:$0xff]
  %v799 = vld [vmem:[%s1] sm:$0xf]
  %v800 = vld [vmem:[%s1 + $0x4] sm:$0xf]
  %v801 = vld [vmem:[%s1 + $0x8] sm:$0xf]
  %v802 = vld [vmem:[%s1 + $0xc] sm:$0xf]
  %v803 = vld [vmem:[%s1 + $0x10] sm:$0xf]
  %v804 = vld [vmem:[%s1 + $0x14] sm:$0xf]
  %v805 = vld [vmem:[%s1 + $0x18] sm:$0xf]
  %v806 = vld [vmem:[%s1 + $0x1c] sm:$0xf]
  %v807 = vld [vmem:[%s1 + $0x20] sm:$0xf]
  %v808 = vld [vmem:[%s1 + $0x24] sm:$0xf]
  %v809 = vld [vmem:[%s1 + $0x28] sm:$0xf]
  %v810 = vld [vmem:[%s1 + $0x2c] sm:$0xf]
  %v811 = vld [vmem:[%s1 + $0x30] sm:$0xf]
  %v812 = vld [vmem:[%s1 + $0x34] sm:$0xf]
  %v813 = vld [vmem:[%s1 + $0x38] sm:$0xf]
  %v814 = vld [vmem:[%s1 + $0x3c] sm:$0xf]
  %v815 = vld [vmem:[%s1 + $0x40] sm:$0xf]
  %v816 = vld [vmem:[%s1 + $0x44] sm:$0xf]
  %v817 = vld [vmem:[%s1 + $0x48] sm:$0xf]
  %v818 = vld [vmem:[%s1 + $0x4c] sm:$0xf]
  %v819 = vld [vmem:[%s1 + $0x50] sm:$0xf]
  %v820 = vld [vmem:[%s1 + $0x54] sm:$0xf]
  %v821 = vld [vmem:[%s1 + $0x58] sm:$0xf]
  %v822 = vld [vmem:[%s1 + $0x5c] sm:$0xf]
  %v823 = vld [vmem:[%s1 + $0x60] sm:$0xf]
  %v824 = vld [vmem:[%s1 + $0x64] sm:$0xf]
  %v825 = vld [vmem:[%s1 + $0x68] sm:$0xf]
  %v826 = vld [vmem:[%s1 + $0x6c] sm:$0xf]
  %v827 = vld [vmem:[%s1 + $0x70] sm:$0xf]
  %v828 = vld [vmem:[%s1 + $0x74] sm:$0xf]
  %v829 = vld [vmem:[%s1 + $0x78] sm:$0xf]
  %v830 = vld [vmem:[%s1 + $0x7c] sm:$0xf]
  %v837 = vunpack.c.l.b16 %v793
  %v838 = vunpack.c.h.b16 %v793
  %v839 = vunpack.c.l.b16 %v794
  %v840 = vunpack.c.h.b16 %v794
  %v841 = vunpack.c.l.b16 %v795
  %v842 = vunpack.c.h.b16 %v795
  %v843 = vunpack.c.l.b16 %v796
  %v844 = vunpack.c.h.b16 %v796
  %v845 = vunpack.c.l.b16 %v797
  %v846 = vunpack.c.h.b16 %v797
  %v847 = vunpack.c.l.b16 %v798
  %v848 = vunpack.c.h.b16 %v798
  %v849 = vpack.c.b16 %v839, %v837
  %v850 = vpack.c.b16 %v840, %v838
  %v851 = vpack.c.b16 %v843, %v841
  %v852 = vpack.c.b16 %v844, %v842
  %v853 = vpack.c.b16 %v847, %v845
  %v854 = vpack.c.b16 %v848, %v846
  %v893 = vunpack.c.l.b16 %v799
  %v894 = vunpack.c.l.b16 %v800
  %v895 = vunpack.c.l.b16 %v801
  %v896 = vunpack.c.l.b16 %v802
  %v897 = vunpack.c.l.b16 %v803
  %v898 = vunpack.c.l.b16 %v804
  %v899 = vunpack.c.l.b16 %v805
  %v900 = vunpack.c.l.b16 %v806
  %v901 = vunpack.c.l.b16 %v807
  %v902 = vunpack.c.l.b16 %v808
  %v903 = vunpack.c.l.b16 %v809
  %v904 = vunpack.c.l.b16 %v810
  %v905 = vunpack.c.l.b16 %v811
  %v906 = vunpack.c.l.b16 %v812
  %v907 = vunpack.c.l.b16 %v813
  %v908 = vunpack.c.l.b16 %v814
  %v909 = vunpack.c.l.b16 %v815
  %v910 = vunpack.c.l.b16 %v816
  %v911 = vunpack.c.l.b16 %v817
  %v912 = vunpack.c.l.b16 %v818
  %v913 = vunpack.c.l.b16 %v819
  %v914 = vunpack.c.l.b16 %v820
  %v915 = vunpack.c.l.b16 %v821
  %v916 = vunpack.c.l.b16 %v822
  %v917 = vunpack.c.l.b16 %v823
  %v918 = vunpack.c.l.b16 %v824
  %v919 = vunpack.c.l.b16 %v825
  %v920 = vunpack.c.l.b16 %v826
  %v921 = vunpack.c.l.b16 %v827
  %v922 = vunpack.c.l.b16 %v828
  %v923 = vunpack.c.l.b16 %v829
  %v924 = vunpack.c.l.b16 %v830
  %v925 = vpack.c.b16 %v894, %v893
  %v926 = vpack.c.b16 %v896, %v895
  %v927 = vpack.c.b16 %v898, %v897
  %v928 = vpack.c.b16 %v900, %v899
  %v929 = vpack.c.b16 %v902, %v901
  %v930 = vpack.c.b16 %v904, %v903
  %v931 = vpack.c.b16 %v906, %v905
  %v932 = vpack.c.b16 %v908, %v907
  %v933 = vpack.c.b16 %v910, %v909
  %v934 = vpack.c.b16 %v912, %v911
  %v935 = vpack.c.b16 %v914, %v913
  %v936 = vpack.c.b16 %v916, %v915
  %v937 = vpack.c.b16 %v918, %v917
  %v938 = vpack.c.b16 %v920, %v919
  %v939 = vpack.c.b16 %v922, %v921
  %v940 = vpack.c.b16 %v924, %v923
  %957 = vmatprep.subr.bf16.mxu0 0
  %958 = vmatpush1.bf16.msra.mxu0 %v925
  %959 = vmatprep.subr.bf16.mxu0 0
  %960 = vmatpush1.bf16.msra.mxu0 %v926
  %961 = vmatprep.subr.bf16.mxu0 0
  %962 = vmatpush1.bf16.msra.mxu0 %v927
  %963 = vmatprep.subr.bf16.mxu0 0
  %964 = vmatpush1.bf16.msra.mxu0 %v928
  %965 = vmatprep.subr.bf16.mxu0 0
  %966 = vmatpush1.bf16.msra.mxu0 %v929
  %967 = vmatprep.subr.bf16.mxu0 0
  %968 = vmatpush1.bf16.msra.mxu0 %v930
  %969 = vmatprep.subr.bf16.mxu0 0
  %970 = vmatpush1.bf16.msra.mxu0 %v931
  %971 = vmatprep.subr.bf16.mxu0 0
  %972 = vmatpush1.bf16.msra.mxu0 %v932
  %973 = vmatprep.subr.bf16.mxu0 0
  %974 = vmatpush1.bf16.msra.mxu0 %v933
  %975 = vmatprep.subr.bf16.mxu0 0
  %976 = vmatpush1.bf16.msra.mxu0 %v934
  %977 = vmatprep.subr.bf16.mxu0 0
  %978 = vmatpush1.bf16.msra.mxu0 %v935
  %979 = vmatprep.subr.bf16.mxu0 0
  %980 = vmatpush1.bf16.msra.mxu0 %v936
  %981 = vmatprep.subr.bf16.mxu0 0
  %982 = vmatpush1.bf16.msra.mxu0 %v937
  %983 = vmatprep.subr.bf16.mxu0 0
  %984 = vmatpush1.bf16.msra.mxu0 %v938
  %985 = vmatprep.subr.bf16.mxu0 0
  %986 = vmatpush1.bf16.msra.mxu0 %v939
  %987 = vmatprep.subr.bf16.mxu0 0
  %988 = vmatpush1.bf16.msra.mxu0 %v940
  %989 = vmatprep.mubr.bf16.mxu0 %v850
  %990 = vmatmul.mubr.bf16.gmra.mrb[0].mxu0 %v849
  %v991 = vpop.f32.mrb[0].mxu0
  %v992 = vadd.f32 %v63, %v991
  %v993 = vpop.f32.mrb[0].mxu0
  %v994 = vpop.f32.mrb[0].mxu0
  %v995 = vadd.f32 %v63, %v994
  %v996 = vpop.f32.mrb[0].mxu0
  %997 = vmatprep.mubr.bf16.mxu0 %v852
  %998 = vmatmul.mubr.bf16.gmra.mrb[0].mxu0 %v851
  %v999 = vpop.f32.mrb[0].mxu0
  %v1000 = vadd.f32 %v63, %v999
  %v1001 = vpop.f32.mrb[0].mxu0
  %v1002 = vpop.f32.mrb[0].mxu0
  %v1003 = vadd.f32 %v63, %v1002
  %v1004 = vpop.f32.mrb[0].mxu0
  %1005 = vmatprep.mubr.bf16.mxu0 %v854
  %1006 = vmatmul.mubr.bf16.gmra.mrb[0].mxu0 %v853
  %v1007 = vpop.f32.mrb[0].mxu0
  %v1008 = vadd.f32 %v63, %v1007
  %v1009 = vpop.f32.mrb[0].mxu0
  %v1010 = vpop.f32.mrb[0].mxu0
  %v1011 = vadd.f32 %v63, %v1010
  %v1012 = vpop.f32.mrb[0].mxu0
  %1013 = vdwg.mxu0
  %v1014 = vmax.f32 %v992, 0.0
  %v1015 = vmax.f32 %v995, 0.0
  %v1016 = vmax.f32 %v1000, 0.0
  %v1017 = vmax.f32 %v1003, 0.0
  %v1018 = vmax.f32 %v1008, 0.0
  %v1019 = vmax.f32 %v1011, 0.0
  %1021 = vrot.lane.b32.xlu0 %v1014, 32
  %v1022 = vpop.permute.xlu0 %1021
  %1024 = vst.msk [vmem:[#allocation2 + $0x10] sm:$0xff] %vm265, %v1022
  %1026 = vrot.lane.b32.xlu0 %v1015, 48
  %v1027 = vpop.permute.xlu0 %1026
  %1029 = vst.msk [vmem:[#allocation2 + $0x10] sm:$0xff] %vm271, %v1027
  %1031 = vrot.lane.b32.xlu0 %v1016, 64
  %v1032 = vpop.permute.xlu0 %1031
  %1034 = vst.msk [vmem:[#allocation2 + $0x10] sm:$0xff] %vm277, %v1032
  %1036 = vrot.lane.b32.xlu0 %v1017, 80
  %v1037 = vpop.permute.xlu0 %1036
  %1039 = vst.msk [vmem:[#allocation2 + $0x10] sm:$0xff] %vm283, %v1037
  %1041 = vrot.lane.b32.xlu0 %v1018, 96
  %v1042 = vpop.permute.xlu0 %1041
  %1044 = vst.msk [vmem:[#allocation2 + $0x10] sm:$0xff] %vm516, %v1042
  %1046 = vrot.lane.b32.xlu0 %v1019, 112
  %v1047 = vpop.permute.xlu0 %1046
  %1049 = vst.msk [vmem:[#allocation2 + $0x10] sm:$0xff] %vm522, %v1047
  %v1050 = vld [vmem:[%s0 + $0xc0] sm:$0xff]
  %v1051 = vld [vmem:[%s0 + $0xc8] sm:$0xff]
  %v1052 = vld [vmem:[%s0 + $0xd0] sm:$0xff]
  %v1053 = vld [vmem:[%s0 + $0xd8] sm:$0xff]
  %v1054 = vld [vmem:[%s0 + $0xe0] sm:$0xff]
  %v1055 = vld [vmem:[%s0 + $0xe8] sm:$0xff]
  %v1056 = vld [vmem:[%s1] sm:$0xf]
  %v1057 = vld [vmem:[%s1 + $0x4] sm:$0xf]
  %v1058 = vld [vmem:[%s1 + $0x8] sm:$0xf]
  %v1059 = vld [vmem:[%s1 + $0xc] sm:$0xf]
  %v1060 = vld [vmem:[%s1 + $0x10] sm:$0xf]
  %v1061 = vld [vmem:[%s1 + $0x14] sm:$0xf]
  %v1062 = vld [vmem:[%s1 + $0x18] sm:$0xf]
  %v1063 = vld [vmem:[%s1 + $0x1c] sm:$0xf]
  %v1064 = vld [vmem:[%s1 + $0x20] sm:$0xf]
  %v1065 = vld [vmem:[%s1 + $0x24] sm:$0xf]
  %v1066 = vld [vmem:[%s1 + $0x28] sm:$0xf]
  %v1067 = vld [vmem:[%s1 + $0x2c] sm:$0xf]
  %v1068 = vld [vmem:[%s1 + $0x30] sm:$0xf]
  %v1069 = vld [vmem:[%s1 + $0x34] sm:$0xf]
  %v1070 = vld [vmem:[%s1 + $0x38] sm:$0xf]
  %v1071 = vld [vmem:[%s1 + $0x3c] sm:$0xf]
  %v1072 = vld [vmem:[%s1 + $0x40] sm:$0xf]
  %v1073 = vld [vmem:[%s1 + $0x44] sm:$0xf]
  %v1074 = vld [vmem:[%s1 + $0x48] sm:$0xf]
  %v1075 = vld [vmem:[%s1 + $0x4c] sm:$0xf]
  %v1076 = vld [vmem:[%s1 + $0x50] sm:$0xf]
  %v1077 = vld [vmem:[%s1 + $0x54] sm:$0xf]
  %v1078 = vld [vmem:[%s1 + $0x58] sm:$0xf]
  %v1079 = vld [vmem:[%s1 + $0x5c] sm:$0xf]
  %v1080 = vld [vmem:[%s1 + $0x60] sm:$0xf]
  %v1081 = vld [vmem:[%s1 + $0x64] sm:$0xf]
  %v1082 = vld [vmem:[%s1 + $0x68] sm:$0xf]
  %v1083 = vld [vmem:[%s1 + $0x6c] sm:$0xf]
  %v1084 = vld [vmem:[%s1 + $0x70] sm:$0xf]
  %v1085 = vld [vmem:[%s1 + $0x74] sm:$0xf]
  %v1086 = vld [vmem:[%s1 + $0x78] sm:$0xf]
  %v1087 = vld [vmem:[%s1 + $0x7c] sm:$0xf]
  %v1094 = vunpack.c.l.b16 %v1050
  %v1095 = vunpack.c.h.b16 %v1050
  %v1096 = vunpack.c.l.b16 %v1051
  %v1097 = vunpack.c.h.b16 %v1051
  %v1098 = vunpack.c.l.b16 %v1052
  %v1099 = vunpack.c.h.b16 %v1052
  %v1100 = vunpack.c.l.b16 %v1053
  %v1101 = vunpack.c.h.b16 %v1053
  %v1102 = vunpack.c.l.b16 %v1054
  %v1103 = vunpack.c.h.b16 %v1054
  %v1104 = vunpack.c.l.b16 %v1055
  %v1105 = vunpack.c.h.b16 %v1055
  %v1106 = vpack.c.b16 %v1096, %v1094
  %v1107 = vpack.c.b16 %v1097, %v1095
  %v1108 = vpack.c.b16 %v1100, %v1098
  %v1109 = vpack.c.b16 %v1101, %v1099
  %v1110 = vpack.c.b16 %v1104, %v1102
  %v1111 = vpack.c.b16 %v1105, %v1103
  %v1150 = vunpack.c.l.b16 %v1056
  %v1151 = vunpack.c.l.b16 %v1057
  %v1152 = vunpack.c.l.b16 %v1058
  %v1153 = vunpack.c.l.b16 %v1059
  %v1154 = vunpack.c.l.b16 %v1060
  %v1155 = vunpack.c.l.b16 %v1061
  %v1156 = vunpack.c.l.b16 %v1062
  %v1157 = vunpack.c.l.b16 %v1063
  %v1158 = vunpack.c.l.b16 %v1064
  %v1159 = vunpack.c.l.b16 %v1065
  %v1160 = vunpack.c.l.b16 %v1066
  %v1161 = vunpack.c.l.b16 %v1067
  %v1162 = vunpack.c.l.b16 %v1068
  %v1163 = vunpack.c.l.b16 %v1069
  %v1164 = vunpack.c.l.b16 %v1070
  %v1165 = vunpack.c.l.b16 %v1071
  %v1166 = vunpack.c.l.b16 %v1072
  %v1167 = vunpack.c.l.b16 %v1073
  %v1168 = vunpack.c.l.b16 %v1074
  %v1169 = vunpack.c.l.b16 %v1075
  %v1170 = vunpack.c.l.b16 %v1076
  %v1171 = vunpack.c.l.b16 %v1077
  %v1172 = vunpack.c.l.b16 %v1078
  %v1173 = vunpack.c.l.b16 %v1079
  %v1174 = vunpack.c.l.b16 %v1080
  %v1175 = vunpack.c.l.b16 %v1081
  %v1176 = vunpack.c.l.b16 %v1082
  %v1177 = vunpack.c.l.b16 %v1083
  %v1178 = vunpack.c.l.b16 %v1084
  %v1179 = vunpack.c.l.b16 %v1085
  %v1180 = vunpack.c.l.b16 %v1086
  %v1181 = vunpack.c.l.b16 %v1087
  %v1182 = vpack.c.b16 %v1151, %v1150
  %v1183 = vpack.c.b16 %v1153, %v1152
  %v1184 = vpack.c.b16 %v1155, %v1154
  %v1185 = vpack.c.b16 %v1157, %v1156
  %v1186 = vpack.c.b16 %v1159, %v1158
  %v1187 = vpack.c.b16 %v1161, %v1160
  %v1188 = vpack.c.b16 %v1163, %v1162
  %v1189 = vpack.c.b16 %v1165, %v1164
  %v1190 = vpack.c.b16 %v1167, %v1166
  %v1191 = vpack.c.b16 %v1169, %v1168
  %v1192 = vpack.c.b16 %v1171, %v1170
  %v1193 = vpack.c.b16 %v1173, %v1172
  %v1194 = vpack.c.b16 %v1175, %v1174
  %v1195 = vpack.c.b16 %v1177, %v1176
  %v1196 = vpack.c.b16 %v1179, %v1178
  %v1197 = vpack.c.b16 %v1181, %v1180
  %1214 = vmatprep.subr.bf16.mxu0 0
  %1215 = vmatpush1.bf16.msra.mxu0 %v1182
  %1216 = vmatprep.subr.bf16.mxu0 0
  %1217 = vmatpush1.bf16.msra.mxu0 %v1183
  %1218 = vmatprep.subr.bf16.mxu0 0
  %1219 = vmatpush1.bf16.msra.mxu0 %v1184
  %1220 = vmatprep.subr.bf16.mxu0 0
  %1221 = vmatpush1.bf16.msra.mxu0 %v1185
  %1222 = vmatprep.subr.bf16.mxu0 0
  %1223 = vmatpush1.bf16.msra.mxu0 %v1186
  %1224 = vmatprep.subr.bf16.mxu0 0
  %1225 = vmatpush1.bf16.msra.mxu0 %v1187
  %1226 = vmatprep.subr.bf16.mxu0 0
  %1227 = vmatpush1.bf16.msra.mxu0 %v1188
  %1228 = vmatprep.subr.bf16.mxu0 0
  %1229 = vmatpush1.bf16.msra.mxu0 %v1189
  %1230 = vmatprep.subr.bf16.mxu0 0
  %1231 = vmatpush1.bf16.msra.mxu0 %v1190
  %1232 = vmatprep.subr.bf16.mxu0 0
  %1233 = vmatpush1.bf16.msra.mxu0 %v1191
  %1234 = vmatprep.subr.bf16.mxu0 0
  %1235 = vmatpush1.bf16.msra.mxu0 %v1192
  %1236 = vmatprep.subr.bf16.mxu0 0
  %1237 = vmatpush1.bf16.msra.mxu0 %v1193
  %1238 = vmatprep.subr.bf16.mxu0 0
  %1239 = vmatpush1.bf16.msra.mxu0 %v1194
  %1240 = vmatprep.subr.bf16.mxu0 0
  %1241 = vmatpush1.bf16.msra.mxu0 %v1195
  %1242 = vmatprep.subr.bf16.mxu0 0
  %1243 = vmatpush1.bf16.msra.mxu0 %v1196
  %1244 = vmatprep.subr.bf16.mxu0 0
  %1245 = vmatpush1.bf16.msra.mxu0 %v1197
  %1246 = vmatprep.mubr.bf16.mxu0 %v1107
  %1247 = vmatmul.mubr.bf16.gmra.mrb[0].mxu0 %v1106
  %v1248 = vpop.f32.mrb[0].mxu0
  %v1249 = vadd.f32 %v63, %v1248
  %v1250 = vpop.f32.mrb[0].mxu0
  %v1251 = vpop.f32.mrb[0].mxu0
  %v1252 = vadd.f32 %v63, %v1251
  %v1253 = vpop.f32.mrb[0].mxu0
  %1254 = vmatprep.mubr.bf16.mxu0 %v1109
  %1255 = vmatmul.mubr.bf16.gmra.mrb[0].mxu0 %v1108
  %v1256 = vpop.f32.mrb[0].mxu0
  %v1257 = vadd.f32 %v63, %v1256
  %v1258 = vpop.f32.mrb[0].mxu0
  %v1259 = vpop.f32.mrb[0].mxu0
  %v1260 = vadd.f32 %v63, %v1259
  %v1261 = vpop.f32.mrb[0].mxu0
  %1262 = vmatprep.mubr.bf16.mxu0 %v1111
  %1263 = vmatmul.mubr.bf16.gmra.mrb[0].mxu0 %v1110
  %v1264 = vpop.f32.mrb[0].mxu0
  %v1265 = vadd.f32 %v63, %v1264
  %v1266 = vpop.f32.mrb[0].mxu0
  %v1267 = vpop.f32.mrb[0].mxu0
  %v1268 = vadd.f32 %v63, %v1267
  %v1269 = vpop.f32.mrb[0].mxu0
  %1270 = vdwg.mxu0
  %v1271 = vmax.f32 %v1249, 0.0
  %v1272 = vmax.f32 %v1252, 0.0
  %v1273 = vmax.f32 %v1257, 0.0
  %v1274 = vmax.f32 %v1260, 0.0
  %v1275 = vmax.f32 %v1265, 0.0
  %v1276 = vmax.f32 %v1268, 0.0
  %1277 = vst.msk [vmem:[#allocation2 + $0x18] sm:$0xff] %vm253, %v1271
  %1279 = vrot.lane.b32.xlu0 %v1272, 16
  %v1280 = vpop.permute.xlu0 %1279
  %1282 = vst.msk [vmem:[#allocation2 + $0x18] sm:$0xff] %vm259, %v1280
  %1284 = vrot.lane.b32.xlu0 %v1273, 32
  %v1285 = vpop.permute.xlu0 %1284
  %1287 = vst.msk [vmem:[#allocation2 + $0x18] sm:$0xff] %vm265, %v1285
  %1289 = vrot.lane.b32.xlu0 %v1274, 48
  %v1290 = vpop.permute.xlu0 %1289
  %1292 = vst.msk [vmem:[#allocation2 + $0x18] sm:$0xff] %vm271, %v1290
  %1294 = vrot.lane.b32.xlu0 %v1275, 64
  %v1295 = vpop.permute.xlu0 %1294
  %1297 = vst.msk [vmem:[#allocation2 + $0x18] sm:$0xff] %vm277, %v1295
  %1299 = vrot.lane.b32.xlu0 %v1276, 80
  %v1300 = vpop.permute.xlu0 %1299
  %1302 = vst.msk [vmem:[#allocation2 + $0x18] sm:$0xff] %vm283, %v1300
  %v1303 = vld [vmem:[%s0 + $0xf0] sm:$0xff]
  %v1304 = vld [vmem:[%s0 + $0xf8] sm:$0xff]
  %v1305 = vld [vmem:[%s0 + $0x100] sm:$0xff]
  %v1306 = vld [vmem:[%s0 + $0x108] sm:$0xff]
  %v1307 = vld [vmem:[%s0 + $0x110] sm:$0xff]
  %v1308 = vld [vmem:[%s0 + $0x118] sm:$0xff]
  %v1309 = vld [vmem:[%s1] sm:$0xf]
  %v1310 = vld [vmem:[%s1 + $0x4] sm:$0xf]
  %v1311 = vld [vmem:[%s1 + $0x8] sm:$0xf]
  %v1312 = vld [vmem:[%s1 + $0xc] sm:$0xf]
  %v1313 = vld [vmem:[%s1 + $0x10] sm:$0xf]
  %v1314 = vld [vmem:[%s1 + $0x14] sm:$0xf]
  %v1315 = vld [vmem:[%s1 + $0x18] sm:$0xf]
  %v1316 = vld [vmem:[%s1 + $0x1c] sm:$0xf]
  %v1317 = vld [vmem:[%s1 + $0x20] sm:$0xf]
  %v1318 = vld [vmem:[%s1 + $0x24] sm:$0xf]
  %v1319 = vld [vmem:[%s1 + $0x28] sm:$0xf]
  %v1320 = vld [vmem:[%s1 + $0x2c] sm:$0xf]
  %v1321 = vld [vmem:[%s1 + $0x30] sm:$0xf]
  %v1322 = vld [vmem:[%s1 + $0x34] sm:$0xf]
  %v1323 = vld [vmem:[%s1 + $0x38] sm:$0xf]
  %v1324 = vld [vmem:[%s1 + $0x3c] sm:$0xf]
  %v1325 = vld [vmem:[%s1 + $0x40] sm:$0xf]
  %v1326 = vld [vmem:[%s1 + $0x44] sm:$0xf]
  %v1327 = vld [vmem:[%s1 + $0x48] sm:$0xf]
  %v1328 = vld [vmem:[%s1 + $0x4c] sm:$0xf]
  %v1329 = vld [vmem:[%s1 + $0x50] sm:$0xf]
  %v1330 = vld [vmem:[%s1 + $0x54] sm:$0xf]
  %v1331 = vld [vmem:[%s1 + $0x58] sm:$0xf]
  %v1332 = vld [vmem:[%s1 + $0x5c] sm:$0xf]
  %v1333 = vld [vmem:[%s1 + $0x60] sm:$0xf]
  %v1334 = vld [vmem:[%s1 + $0x64] sm:$0xf]
  %v1335 = vld [vmem:[%s1 + $0x68] sm:$0xf]
  %v1336 = vld [vmem:[%s1 + $0x6c] sm:$0xf]
  %v1337 = vld [vmem:[%s1 + $0x70] sm:$0xf]
  %v1338 = vld [vmem:[%s1 + $0x74] sm:$0xf]
  %v1339 = vld [vmem:[%s1 + $0x78] sm:$0xf]
  %v1340 = vld [vmem:[%s1 + $0x7c] sm:$0xf]
  %v1347 = vunpack.c.l.b16 %v1303
  %v1348 = vunpack.c.h.b16 %v1303
  %v1349 = vunpack.c.l.b16 %v1304
  %v1350 = vunpack.c.h.b16 %v1304
  %v1351 = vunpack.c.l.b16 %v1305
  %v1352 = vunpack.c.h.b16 %v1305
  %v1353 = vunpack.c.l.b16 %v1306
  %v1354 = vunpack.c.h.b16 %v1306
  %v1355 = vunpack.c.l.b16 %v1307
  %v1356 = vunpack.c.h.b16 %v1307
  %v1357 = vunpack.c.l.b16 %v1308
  %v1358 = vunpack.c.h.b16 %v1308
  %v1359 = vpack.c.b16 %v1349, %v1347
  %v1360 = vpack.c.b16 %v1350, %v1348
  %v1361 = vpack.c.b16 %v1353, %v1351
  %v1362 = vpack.c.b16 %v1354, %v1352
  %v1363 = vpack.c.b16 %v1357, %v1355
  %v1364 = vpack.c.b16 %v1358, %v1356
  %v1403 = vunpack.c.l.b16 %v1309
  %v1404 = vunpack.c.l.b16 %v1310
  %v1405 = vunpack.c.l.b16 %v1311
  %v1406 = vunpack.c.l.b16 %v1312
  %v1407 = vunpack.c.l.b16 %v1313
  %v1408 = vunpack.c.l.b16 %v1314
  %v1409 = vunpack.c.l.b16 %v1315
  %v1410 = vunpack.c.l.b16 %v1316
  %v1411 = vunpack.c.l.b16 %v1317
  %v1412 = vunpack.c.l.b16 %v1318
  %v1413 = vunpack.c.l.b16 %v1319
  %v1414 = vunpack.c.l.b16 %v1320
  %v1415 = vunpack.c.l.b16 %v1321
  %v1416 = vunpack.c.l.b16 %v1322
  %v1417 = vunpack.c.l.b16 %v1323
  %v1418 = vunpack.c.l.b16 %v1324
  %v1419 = vunpack.c.l.b16 %v1325
  %v1420 = vunpack.c.l.b16 %v1326
  %v1421 = vunpack.c.l.b16 %v1327
  %v1422 = vunpack.c.l.b16 %v1328
  %v1423 = vunpack.c.l.b16 %v1329
  %v1424 = vunpack.c.l.b16 %v1330
  %v1425 = vunpack.c.l.b16 %v1331
  %v1426 = vunpack.c.l.b16 %v1332
  %v1427 = vunpack.c.l.b16 %v1333
  %v1428 = vunpack.c.l.b16 %v1334
  %v1429 = vunpack.c.l.b16 %v1335
  %v1430 = vunpack.c.l.b16 %v1336
  %v1431 = vunpack.c.l.b16 %v1337
  %v1432 = vunpack.c.l.b16 %v1338
  %v1433 = vunpack.c.l.b16 %v1339
  %v1434 = vunpack.c.l.b16 %v1340
  %v1435 = vpack.c.b16 %v1404, %v1403
  %v1436 = vpack.c.b16 %v1406, %v1405
  %v1437 = vpack.c.b16 %v1408, %v1407
  %v1438 = vpack.c.b16 %v1410, %v1409
  %v1439 = vpack.c.b16 %v1412, %v1411
  %v1440 = vpack.c.b16 %v1414, %v1413
  %v1441 = vpack.c.b16 %v1416, %v1415
  %v1442 = vpack.c.b16 %v1418, %v1417
  %v1443 = vpack.c.b16 %v1420, %v1419
  %v1444 = vpack.c.b16 %v1422, %v1421
  %v1445 = vpack.c.b16 %v1424, %v1423
  %v1446 = vpack.c.b16 %v1426, %v1425
  %v1447 = vpack.c.b16 %v1428, %v1427
  %v1448 = vpack.c.b16 %v1430, %v1429
  %v1449 = vpack.c.b16 %v1432, %v1431
  %v1450 = vpack.c.b16 %v1434, %v1433
  %1467 = vmatprep.subr.bf16.mxu0 0
  %1468 = vmatpush1.bf16.msra.mxu0 %v1435
  %1469 = vmatprep.subr.bf16.mxu0 0
  %1470 = vmatpush1.bf16.msra.mxu0 %v1436
  %1471 = vmatprep.subr.bf16.mxu0 0
  %1472 = vmatpush1.bf16.msra.mxu0 %v1437
  %1473 = vmatprep.subr.bf16.mxu0 0
  %1474 = vmatpush1.bf16.msra.mxu0 %v1438
  %1475 = vmatprep.subr.bf16.mxu0 0
  %1476 = vmatpush1.bf16.msra.mxu0 %v1439
  %1477 = vmatprep.subr.bf16.mxu0 0
  %1478 = vmatpush1.bf16.msra.mxu0 %v1440
  %1479 = vmatprep.subr.bf16.mxu0 0
  %1480 = vmatpush1.bf16.msra.mxu0 %v1441
  %1481 = vmatprep.subr.bf16.mxu0 0
  %1482 = vmatpush1.bf16.msra.mxu0 %v1442
  %1483 = vmatprep.subr.bf16.mxu0 0
  %1484 = vmatpush1.bf16.msra.mxu0 %v1443
  %1485 = vmatprep.subr.bf16.mxu0 0
  %1486 = vmatpush1.bf16.msra.mxu0 %v1444
  %1487 = vmatprep.subr.bf16.mxu0 0
  %1488 = vmatpush1.bf16.msra.mxu0 %v1445
  %1489 = vmatprep.subr.bf16.mxu0 0
  %1490 = vmatpush1.bf16.msra.mxu0 %v1446
  %1491 = vmatprep.subr.bf16.mxu0 0
  %1492 = vmatpush1.bf16.msra.mxu0 %v1447
  %1493 = vmatprep.subr.bf16.mxu0 0
  %1494 = vmatpush1.bf16.msra.mxu0 %v1448
  %1495 = vmatprep.subr.bf16.mxu0 0
  %1496 = vmatpush1.bf16.msra.mxu0 %v1449
  %1497 = vmatprep.subr.bf16.mxu0 0
  %1498 = vmatpush1.bf16.msra.mxu0 %v1450
  %1499 = vmatprep.mubr.bf16.mxu0 %v1360
  %1500 = vmatmul.mubr.bf16.gmra.mrb[0].mxu0 %v1359
  %v1501 = vpop.f32.mrb[0].mxu0
  %v1502 = vadd.f32 %v63, %v1501
  %v1503 = vpop.f32.mrb[0].mxu0
  %v1504 = vpop.f32.mrb[0].mxu0
  %v1505 = vadd.f32 %v63, %v1504
  %v1506 = vpop.f32.mrb[0].mxu0
  %1507 = vmatprep.mubr.bf16.mxu0 %v1362
  %1508 = vmatmul.mubr.bf16.gmra.mrb[0].mxu0 %v1361
  %v1509 = vpop.f32.mrb[0].mxu0
  %v1510 = vadd.f32 %v63, %v1509
  %v1511 = vpop.f32.mrb[0].mxu0
  %v1512 = vpop.f32.mrb[0].mxu0
  %v1513 = vadd.f32 %v63, %v1512
  %v1514 = vpop.f32.mrb[0].mxu0
  %1515 = vmatprep.mubr.bf16.mxu0 %v1364
  %1516 = vmatmul.mubr.bf16.gmra.mrb[0].mxu0 %v1363
  %v1517 = vpop.f32.mrb[0].mxu0
  %v1518 = vadd.f32 %v63, %v1517
  %v1519 = vpop.f32.mrb[0].mxu0
  %v1520 = vpop.f32.mrb[0].mxu0
  %v1521 = vadd.f32 %v63, %v1520
  %v1522 = vpop.f32.mrb[0].mxu0
  %1523 = vdwg.mxu0
  %v1524 = vmax.f32 %v1502, 0.0
  %v1525 = vmax.f32 %v1505, 0.0
  %v1526 = vmax.f32 %v1510, 0.0
  %v1527 = vmax.f32 %v1513, 0.0
  %v1528 = vmax.f32 %v1518, 0.0
  %v1529 = vmax.f32 %v1521, 0.0
  %1531 = vrot.lane.b32.xlu0 %v1524, 96
  %v1532 = vpop.permute.xlu0 %1531
  %1534 = vst.msk [vmem:[#allocation2 + $0x18] sm:$0xff] %vm516, %v1532
  %1536 = vrot.lane.b32.xlu0 %v1525, 112
  %v1537 = vpop.permute.xlu0 %1536
  %1539 = vst.msk [vmem:[#allocation2 + $0x18] sm:$0xff] %vm522, %v1537
  %1540 = vst.msk [vmem:[#allocation2 + $0x20] sm:$0xff] %vm253, %v1526
  %1542 = vrot.lane.b32.xlu0 %v1527, 16
  %v1543 = vpop.permute.xlu0 %1542
  %1545 = vst.msk [vmem:[#allocation2 + $0x20] sm:$0xff] %vm259, %v1543
  %1547 = vrot.lane.b32.xlu0 %v1528, 32
  %v1548 = vpop.permute.xlu0 %1547
  %1550 = vst.msk [vmem:[#allocation2 + $0x20] sm:$0xff] %vm265, %v1548
  %1552 = vrot.lane.b32.xlu0 %v1529, 48
  %v1553 = vpop.permute.xlu0 %1552
  %1555 = vst.msk [vmem:[#allocation2 + $0x20] sm:$0xff] %vm271, %v1553
  %v1556 = vld [vmem:[#allocation2] sm:$0xff]
  %v1557 = vld [vmem:[#allocation2 + $0x8] sm:$0xff]
  %v1558 = vld [vmem:[#allocation2 + $0x10] sm:$0xff]
  %v1559 = vld [vmem:[#allocation2 + $0x18] sm:$0xff]
  %v1560 = vld [vmem:[#allocation2 + $0x20] sm:$0xff]
  %v1561 = vpack.c.bf16 %v1556, %v1556
  %v1562 = vpack.c.bf16 %v1557, %v1557
  %v1563 = vpack.c.bf16 %v1558, %v1558
  %v1564 = vpack.c.bf16 %v1559, %v1559
  %v1565 = vpack.c.bf16 %v1560, %v1560
  %v1566 = vld [vmem:[%s2] sm:$0xf]
  %v1567 = vld [vmem:[%s2 + $0x4] sm:$0xf]
  %v1568 = vld [vmem:[%s2 + $0x8] sm:$0xf]
  %v1569 = vld [vmem:[%s2 + $0xc] sm:$0xf]
  %v1570 = vld [vmem:[%s2 + $0x10] sm:$0xf]
  %v1571 = vld [vmem:[%s2 + $0x14] sm:$0xf]
  %v1572 = vld [vmem:[%s2 + $0x18] sm:$0xf]
  %v1573 = vld [vmem:[%s2 + $0x1c] sm:$0xf]
  %v1574 = vld [vmem:[%s2 + $0x20] sm:$0xf]
  %v1575 = vld [vmem:[%s2 + $0x24] sm:$0xf]
  %v1576 = vld [vmem:[%s2 + $0x28] sm:$0xf]
  %v1577 = vld [vmem:[%s2 + $0x2c] sm:$0xf]
  %v1578 = vld [vmem:[%s2 + $0x30] sm:$0xf]
  %v1579 = vld [vmem:[%s2 + $0x34] sm:$0xf]
  %v1580 = vld [vmem:[%s2 + $0x38] sm:$0xf]
  %v1581 = vld [vmem:[%s2 + $0x3c] sm:$0xf]
  %v1582 = vld [vmem:[%s2 + $0x40] sm:$0xf]
  %v1583 = vld [vmem:[%s2 + $0x44] sm:$0xf]
  %v1584 = vld [vmem:[%s2 + $0x48] sm:$0xf]
  %v1585 = vld [vmem:[%s2 + $0x4c] sm:$0xf]
  %v1586 = vld [vmem:[%s2 + $0x50] sm:$0xf]
  %v1587 = vld [vmem:[%s2 + $0x54] sm:$0xf]
  %v1588 = vld [vmem:[%s2 + $0x58] sm:$0xf]
  %v1589 = vld [vmem:[%s2 + $0x5c] sm:$0xf]
  %v1590 = vld [vmem:[%s2 + $0x60] sm:$0xf]
  %v1591 = vld [vmem:[%s2 + $0x64] sm:$0xf]
  %v1592 = vld [vmem:[%s2 + $0x68] sm:$0xf]
  %v1593 = vld [vmem:[%s2 + $0x6c] sm:$0xf]
  %v1594 = vld [vmem:[%s2 + $0x70] sm:$0xf]
  %v1595 = vld [vmem:[%s2 + $0x74] sm:$0xf]
  %v1596 = vld [vmem:[%s2 + $0x78] sm:$0xf]
  %v1597 = vld [vmem:[%s2 + $0x7c] sm:$0xf]
  %v1598 = vld [vmem:[%s2 + $0x80] sm:$0xf]
  %v1599 = vld [vmem:[%s2 + $0x84] sm:$0xf]
  %v1600 = vld [vmem:[%s2 + $0x88] sm:$0xf]
  %v1601 = vld [vmem:[%s2 + $0x8c] sm:$0xf]
  %v1602 = vld [vmem:[%s2 + $0x90] sm:$0xf]
  %v1603 = vld [vmem:[%s2 + $0x94] sm:$0xf]
  %v1604 = vld [vmem:[%s2 + $0x98] sm:$0xf]
  %v1605 = vld [vmem:[%s2 + $0x9c] sm:$0xf]
  %v1606 = vld [vmem:[%s2 + $0xa0] sm:$0xf]
  %v1607 = vld [vmem:[%s2 + $0xa4] sm:$0xf]
  %v1608 = vld [vmem:[%s2 + $0xa8] sm:$0xf]
  %v1609 = vld [vmem:[%s2 + $0xac] sm:$0xf]
  %v1610 = vld [vmem:[%s2 + $0xb0] sm:$0xf]
  %v1611 = vld [vmem:[%s2 + $0xb4] sm:$0xf]
  %v1612 = vld [vmem:[%s2 + $0xb8] sm:$0xf]
  %v1613 = vld [vmem:[%s2 + $0xbc] sm:$0xf]
  %v1614 = vld [vmem:[%s2 + $0xc0] sm:$0xf]
  %v1615 = vld [vmem:[%s2 + $0xc4] sm:$0xf]
  %v1616 = vld [vmem:[%s2 + $0xc8] sm:$0xf]
  %v1617 = vld [vmem:[%s2 + $0xcc] sm:$0xf]
  %v1618 = vld [vmem:[%s2 + $0xd0] sm:$0xf]
  %v1619 = vld [vmem:[%s2 + $0xd4] sm:$0xf]
  %v1620 = vld [vmem:[%s2 + $0xd8] sm:$0xf]
  %v1621 = vld [vmem:[%s2 + $0xdc] sm:$0xf]
  %v1622 = vld [vmem:[%s2 + $0xe0] sm:$0xf]
  %v1623 = vld [vmem:[%s2 + $0xe4] sm:$0xf]
  %v1624 = vld [vmem:[%s2 + $0xe8] sm:$0xf]
  %v1625 = vld [vmem:[%s2 + $0xec] sm:$0xf]
  %v1626 = vld [vmem:[%s2 + $0xf0] sm:$0xf]
  %v1627 = vld [vmem:[%s2 + $0xf4] sm:$0xf]
  %v1628 = vld [vmem:[%s2 + $0xf8] sm:$0xf]
  %v1629 = vld [vmem:[%s2 + $0xfc] sm:$0xf]
  %v1630 = vld [vmem:[%s2 + $0x100] sm:$0xf]
  %v1631 = vld [vmem:[%s2 + $0x104] sm:$0xf]
  %v1632 = vld [vmem:[%s2 + $0x108] sm:$0xf]
  %v1633 = vld [vmem:[%s2 + $0x10c] sm:$0xf]
  %v1634 = vld [vmem:[%s2 + $0x110] sm:$0xf]
  %v1635 = vld [vmem:[%s2 + $0x114] sm:$0xf]
  %v1636 = vld [vmem:[%s2 + $0x118] sm:$0xf]
  %v1637 = vld [vmem:[%s2 + $0x11c] sm:$0xf]
  %v1638 = vld [vmem:[%s4 + $0x1] sm:$0x1]
  %v1639 = vlaneseq
  %v1640 = vshrl.u32 %v1639, 7
  %v1641 = vsub.s32 0, %v1640
  %v1642 = vrot.slane %v1638, %v1641
  %v1715 = vunpack.c.l.b16 %v1566
  %v1716 = vunpack.c.l.b16 %v1567
  %v1717 = vunpack.c.l.b16 %v1568
  %v1718 = vunpack.c.l.b16 %v1569
  %v1719 = vunpack.c.l.b16 %v1570
  %v1720 = vunpack.c.l.b16 %v1571
  %v1721 = vunpack.c.l.b16 %v1572
  %v1722 = vunpack.c.l.b16 %v1573
  %v1723 = vunpack.c.l.b16 %v1574
  %v1724 = vunpack.c.l.b16 %v1575
  %v1725 = vunpack.c.l.b16 %v1576
  %v1726 = vunpack.c.l.b16 %v1577
  %v1727 = vunpack.c.l.b16 %v1578
  %v1728 = vunpack.c.l.b16 %v1579
  %v1729 = vunpack.c.l.b16 %v1580
  %v1730 = vunpack.c.l.b16 %v1581
  %v1731 = vunpack.c.l.b16 %v1582
  %v1732 = vunpack.c.l.b16 %v1583
  %v1733 = vunpack.c.l.b16 %v1584
  %v1734 = vunpack.c.l.b16 %v1585
  %v1735 = vunpack.c.l.b16 %v1586
  %v1736 = vunpack.c.l.b16 %v1587
  %v1737 = vunpack.c.l.b16 %v1588
  %v1738 = vunpack.c.l.b16 %v1589
  %v1739 = vunpack.c.l.b16 %v1590
  %v1740 = vunpack.c.l.b16 %v1591
  %v1741 = vunpack.c.l.b16 %v1592
  %v1742 = vunpack.c.l.b16 %v1593
  %v1743 = vunpack.c.l.b16 %v1594
  %v1744 = vunpack.c.l.b16 %v1595
  %v1745 = vunpack.c.l.b16 %v1596
  %v1746 = vunpack.c.l.b16 %v1597
  %v1747 = vunpack.c.l.b16 %v1598
  %v1748 = vunpack.c.l.b16 %v1599
  %v1749 = vunpack.c.l.b16 %v1600
  %v1750 = vunpack.c.l.b16 %v1601
  %v1751 = vunpack.c.l.b16 %v1602
  %v1752 = vunpack.c.l.b16 %v1603
  %v1753 = vunpack.c.l.b16 %v1604
  %v1754 = vunpack.c.l.b16 %v1605
  %v1755 = vunpack.c.l.b16 %v1606
  %v1756 = vunpack.c.l.b16 %v1607
  %v1757 = vunpack.c.l.b16 %v1608
  %v1758 = vunpack.c.l.b16 %v1609
  %v1759 = vunpack.c.l.b16 %v1610
  %v1760 = vunpack.c.l.b16 %v1611
  %v1761 = vunpack.c.l.b16 %v1612
  %v1762 = vunpack.c.l.b16 %v1613
  %v1763 = vunpack.c.l.b16 %v1614
  %v1764 = vunpack.c.l.b16 %v1615
  %v1765 = vunpack.c.l.b16 %v1616
  %v1766 = vunpack.c.l.b16 %v1617
  %v1767 = vunpack.c.l.b16 %v1618
  %v1768 = vunpack.c.l.b16 %v1619
  %v1769 = vunpack.c.l.b16 %v1620
  %v1770 = vunpack.c.l.b16 %v1621
  %v1771 = vunpack.c.l.b16 %v1622
  %v1772 = vunpack.c.l.b16 %v1623
  %v1773 = vunpack.c.l.b16 %v1624
  %v1774 = vunpack.c.l.b16 %v1625
  %v1775 = vunpack.c.l.b16 %v1626
  %v1776 = vunpack.c.l.b16 %v1627
  %v1777 = vunpack.c.l.b16 %v1628
  %v1778 = vunpack.c.l.b16 %v1629
  %v1779 = vunpack.c.l.b16 %v1630
  %v1780 = vunpack.c.l.b16 %v1631
  %v1781 = vunpack.c.l.b16 %v1632
  %v1782 = vunpack.c.l.b16 %v1633
  %v1783 = vunpack.c.l.b16 %v1634
  %v1784 = vunpack.c.l.b16 %v1635
  %v1785 = vunpack.c.l.b16 %v1636
  %v1786 = vunpack.c.l.b16 %v1637
  %v1787 = vpack.c.b16 %v1716, %v1715
  %v1788 = vpack.c.b16 %v1718, %v1717
  %v1789 = vpack.c.b16 %v1720, %v1719
  %v1790 = vpack.c.b16 %v1722, %v1721
  %v1791 = vpack.c.b16 %v1724, %v1723
  %v1792 = vpack.c.b16 %v1726, %v1725
  %v1793 = vpack.c.b16 %v1728, %v1727
  %v1794 = vpack.c.b16 %v1730, %v1729
  %v1795 = vpack.c.b16 %v1732, %v1731
  %v1796 = vpack.c.b16 %v1734, %v1733
  %v1797 = vpack.c.b16 %v1736, %v1735
  %v1798 = vpack.c.b16 %v1738, %v1737
  %v1799 = vpack.c.b16 %v1740, %v1739
  %v1800 = vpack.c.b16 %v1742, %v1741
  %v1801 = vpack.c.b16 %v1744, %v1743
  %v1802 = vpack.c.b16 %v1746, %v1745
  %v1803 = vpack.c.b16 %v1748, %v1747
  %v1804 = vpack.c.b16 %v1750, %v1749
  %v1805 = vpack.c.b16 %v1752, %v1751
  %v1806 = vpack.c.b16 %v1754, %v1753
  %v1807 = vpack.c.b16 %v1756, %v1755
  %v1808 = vpack.c.b16 %v1758, %v1757
  %v1809 = vpack.c.b16 %v1760, %v1759
  %v1810 = vpack.c.b16 %v1762, %v1761
  %v1811 = vpack.c.b16 %v1764, %v1763
  %v1812 = vpack.c.b16 %v1766, %v1765
  %v1813 = vpack.c.b16 %v1768, %v1767
  %v1814 = vpack.c.b16 %v1770, %v1769
  %v1815 = vpack.c.b16 %v1772, %v1771
  %v1816 = vpack.c.b16 %v1774, %v1773
  %v1817 = vpack.c.b16 %v1776, %v1775
  %v1818 = vpack.c.b16 %v1778, %v1777
  %v1819 = vpack.c.b16 %v1780, %v1779
  %v1820 = vpack.c.b16 %v1782, %v1781
  %v1821 = vpack.c.b16 %v1784, %v1783
  %v1822 = vpack.c.b16 %v1786, %v1785
  %vm1859 = vcmask 523264
  %v1861 = vsel %vm1859, %v1565, 0
  %1863 = vmatprep.subr.bf16.mxu0 0
  %1864 = vmatpush1.bf16.msra.mxu0 %v1787
  %1865 = vmatprep.subr.bf16.mxu0 0
  %1866 = vmatpush1.bf16.msra.mxu0 %v1788
  %1867 = vmatprep.subr.bf16.mxu0 0
  %1868 = vmatpush1.bf16.msra.mxu0 %v1789
  %1869 = vmatprep.subr.bf16.mxu0 0
  %1870 = vmatpush1.bf16.msra.mxu0 %v1790
  %1871 = vmatprep.subr.bf16.mxu0 0
  %1872 = vmatpush1.bf16.msra.mxu0 %v1791
  %1873 = vmatprep.subr.bf16.mxu0 0
  %1874 = vmatpush1.bf16.msra.mxu0 %v1792
  %1875 = vmatprep.subr.bf16.mxu0 0
  %1876 = vmatpush1.bf16.msra.mxu0 %v1793
  %1877 = vmatprep.subr.bf16.mxu0 0
  %1878 = vmatpush1.bf16.msra.mxu0 %v1794
  %1879 = vmatprep.subr.bf16.mxu0 0
  %1880 = vmatpush1.bf16.msra.mxu0 %v1795
  %1881 = vmatprep.subr.bf16.mxu0 0
  %1882 = vmatpush1.bf16.msra.mxu0 %v1796
  %1883 = vmatprep.subr.bf16.mxu0 0
  %1884 = vmatpush1.bf16.msra.mxu0 %v1797
  %1885 = vmatprep.subr.bf16.mxu0 0
  %1886 = vmatpush1.bf16.msra.mxu0 %v1798
  %1887 = vmatprep.subr.bf16.mxu0 0
  %1888 = vmatpush1.bf16.msra.mxu0 %v1799
  %1889 = vmatprep.subr.bf16.mxu0 0
  %1890 = vmatpush1.bf16.msra.mxu0 %v1800
  %1891 = vmatprep.subr.bf16.mxu0 0
  %1892 = vmatpush1.bf16.msra.mxu0 %v1801
  %1893 = vmatprep.subr.bf16.mxu0 0
  %1894 = vmatpush1.bf16.msra.mxu0 %v1802
  %1895 = vmatprep.mubr.bf16.mxu0 %v1562
  %1896 = vmatmul.mubr.bf16.gmra.mrb[0].mxu0 %v1561
  %v1897 = vpop.f32.mrb[0].mxu0
  %v1898 = vadd.f32 %v1642, %v1897
  %v1899 = vpop.f32.mrb[0].mxu0
  %v1900 = vpop.f32.mrb[0].mxu0
  %v1901 = vpop.f32.mrb[0].mxu0
  %1902 = vdwg.mxu0
  %1903 = vmatprep.subr.bf16.mxu0 0
  %1904 = vmatpush1.bf16.msra.mxu0 %v1803
  %1905 = vmatprep.subr.bf16.mxu0 0
  %1906 = vmatpush1.bf16.msra.mxu0 %v1804
  %1907 = vmatprep.subr.bf16.mxu0 0
  %1908 = vmatpush1.bf16.msra.mxu0 %v1805
  %1909 = vmatprep.subr.bf16.mxu0 0
  %1910 = vmatpush1.bf16.msra.mxu0 %v1806
  %1911 = vmatprep.subr.bf16.mxu0 0
  %1912 = vmatpush1.bf16.msra.mxu0 %v1807
  %1913 = vmatprep.subr.bf16.mxu0 0
  %1914 = vmatpush1.bf16.msra.mxu0 %v1808
  %1915 = vmatprep.subr.bf16.mxu0 0
  %1916 = vmatpush1.bf16.msra.mxu0 %v1809
  %1917 = vmatprep.subr.bf16.mxu0 0
  %1918 = vmatpush1.bf16.msra.mxu0 %v1810
  %1919 = vmatprep.subr.bf16.mxu0 0
  %1920 = vmatpush1.bf16.msra.mxu0 %v1811
  %1921 = vmatprep.subr.bf16.mxu0 0
  %1922 = vmatpush1.bf16.msra.mxu0 %v1812
  %1923 = vmatprep.subr.bf16.mxu0 0
  %1924 = vmatpush1.bf16.msra.mxu0 %v1813
  %1925 = vmatprep.subr.bf16.mxu0 0
  %1926 = vmatpush1.bf16.msra.mxu0 %v1814
  %1927 = vmatprep.subr.bf16.mxu0 0
  %1928 = vmatpush1.bf16.msra.mxu0 %v1815
  %1929 = vmatprep.subr.bf16.mxu0 0
  %1930 = vmatpush1.bf16.msra.mxu0 %v1816
  %1931 = vmatprep.subr.bf16.mxu0 0
  %1932 = vmatpush1.bf16.msra.mxu0 %v1817
  %1933 = vmatprep.subr.bf16.mxu0 0
  %1934 = vmatpush1.bf16.msra.mxu0 %v1818
  %1935 = vmatprep.mubr.bf16.mxu0 %v1564
  %1936 = vmatmul.mubr.bf16.gmra.mrb[0].mxu0 %v1563
  %v1937 = vpop.f32.mrb[0].mxu0
  %v1938 = vadd.f32 %v1898, %v1937
  %v1939 = vpop.f32.mrb[0].mxu0
  %v1940 = vpop.f32.mrb[0].mxu0
  %v1941 = vpop.f32.mrb[0].mxu0
  %1942 = vdwg.mxu0
  %1943 = vmatprep.subr.bf16.mxu0 0
  %1944 = vmatpush1.bf16.msra.mxu0 %v1819
  %1945 = vmatprep.subr.bf16.mxu0 0
  %1946 = vmatpush1.bf16.msra.mxu0 %v1820
  %1947 = vmatprep.subr.bf16.mxu0 0
  %1948 = vmatpush1.bf16.msra.mxu0 %v1821
  %1949 = vmatprep.subr.bf16.mxu0 0
  %1950 = vmatpush1.bf16.msra.mxu0 %v1822
  %1951 = vmatprep.subr.bf16.mxu0 0
  %1952 = vmatpush1.bf16.msra.mxu0 0
  %1953 = vmatprep.subr.bf16.mxu0 0
  %1954 = vmatpush1.bf16.msra.mxu0 0
  %1955 = vmatprep.subr.bf16.mxu0 0
  %1956 = vmatpush1.bf16.msra.mxu0 0
  %1957 = vmatprep.subr.bf16.mxu0 0
  %1958 = vmatpush1.bf16.msra.mxu0 0
  %1959 = vmatprep.subr.bf16.mxu0 0
  %1960 = vmatpush1.bf16.msra.mxu0 0
  %1961 = vmatprep.subr.bf16.mxu0 0
  %1962 = vmatpush1.bf16.msra.mxu0 0
  %1963 = vmatprep.subr.bf16.mxu0 0
  %1964 = vmatpush1.bf16.msra.mxu0 0
  %1965 = vmatprep.subr.bf16.mxu0 0
  %1966 = vmatpush1.bf16.msra.mxu0 0
  %1967 = vmatprep.subr.bf16.mxu0 0
  %1968 = vmatpush1.bf16.msra.mxu0 0
  %1969 = vmatprep.subr.bf16.mxu0 0
  %1970 = vmatpush1.bf16.msra.mxu0 0
  %1971 = vmatprep.subr.bf16.mxu0 0
  %1972 = vmatpush1.bf16.msra.mxu0 0
  %1973 = vmatprep.subr.bf16.mxu0 0
  %1974 = vmatpush1.bf16.msra.mxu0 0
  %1975 = vmatprep.mubr.bf16.mxu0 0
  %1976 = vmatmul.mubr.bf16.gmra.mrb[0].mxu0 %v1861
  %v1977 = vpop.f32.mrb[0].mxu0
  %v1978 = vadd.f32 %v1938, %v1977
  %v1979 = vpop.f32.mrb[0].mxu0
  %v1980 = vpop.f32.mrb[0].mxu0
  %v1981 = vpop.f32.mrb[0].mxu0
  %1982 = vdwg.mxu0
  %v1983 = vmax.f32 %v1978, 0.0
  %v1984 = vpack.c.bf16 %v1983, %v1983
  %v1985 = vld [vmem:[%s3] sm:$0xf]
  %v1986 = vld [vmem:[%s3 + $0x4] sm:$0xf]
  %v1987 = vld [vmem:[%s3 + $0x8] sm:$0xf]
  %v1988 = vld [vmem:[%s3 + $0xc] sm:$0xf]
  %v1989 = vld [vmem:[%s3 + $0x10] sm:$0xf]
  %v1990 = vld [vmem:[%s3 + $0x14] sm:$0xf]
  %v1991 = vld [vmem:[%s3 + $0x18] sm:$0xf]
  %v1992 = vld [vmem:[%s3 + $0x1c] sm:$0xf]
  %v1993 = vld [vmem:[%s3 + $0x20] sm:$0xf]
  %v1994 = vld [vmem:[%s3 + $0x24] sm:$0xf]
  %v1995 = vld [vmem:[%s3 + $0x28] sm:$0xf]
  %v1996 = vld [vmem:[%s3 + $0x2c] sm:$0xf]
  %v1997 = vld [vmem:[%s3 + $0x30] sm:$0xf]
  %v1998 = vld [vmem:[%s3 + $0x34] sm:$0xf]
  %v1999 = vld [vmem:[%s3 + $0x38] sm:$0xf]
  %v2000 = vld [vmem:[%s3 + $0x3c] sm:$0xf]
  %v2001 = vld [vmem:[%s4 + $0x2] sm:$0x1]
  %v2002 = vlaneseq
  %v2003 = vshrl.u32 %v2002, 7
  %v2004 = vsub.s32 0, %v2003
  %v2005 = vrot.slane %v2001, %v2004
  %v2022 = vunpack.c.l.b16 %v1985
  %v2023 = vunpack.c.l.b16 %v1986
  %v2024 = vunpack.c.l.b16 %v1987
  %v2025 = vunpack.c.l.b16 %v1988
  %v2026 = vunpack.c.l.b16 %v1989
  %v2027 = vunpack.c.l.b16 %v1990
  %v2028 = vunpack.c.l.b16 %v1991
  %v2029 = vunpack.c.l.b16 %v1992
  %v2030 = vunpack.c.l.b16 %v1993
  %v2031 = vunpack.c.l.b16 %v1994
  %v2032 = vunpack.c.l.b16 %v1995
  %v2033 = vunpack.c.l.b16 %v1996
  %v2034 = vunpack.c.l.b16 %v1997
  %v2035 = vunpack.c.l.b16 %v1998
  %v2036 = vunpack.c.l.b16 %v1999
  %v2037 = vunpack.c.l.b16 %v2000
  %v2038 = vpack.c.b16 %v2023, %v2022
  %v2039 = vpack.c.b16 %v2025, %v2024
  %v2040 = vpack.c.b16 %v2027, %v2026
  %v2041 = vpack.c.b16 %v2029, %v2028
  %v2042 = vpack.c.b16 %v2031, %v2030
  %v2043 = vpack.c.b16 %v2033, %v2032
  %v2044 = vpack.c.b16 %v2035, %v2034
  %v2045 = vpack.c.b16 %v2037, %v2036
  %2054 = vmatprep.subr.bf16.mxu0 0
  %2055 = vmatpush1.bf16.msra.mxu0 %v2038
  %2056 = vmatprep.subr.bf16.mxu0 0
  %2057 = vmatpush1.bf16.msra.mxu0 %v2039
  %2058 = vmatprep.subr.bf16.mxu0 0
  %2059 = vmatpush1.bf16.msra.mxu0 %v2040
  %2060 = vmatprep.subr.bf16.mxu0 0
  %2061 = vmatpush1.bf16.msra.mxu0 %v2041
  %2062 = vmatprep.subr.bf16.mxu0 0
  %2063 = vmatpush1.bf16.msra.mxu0 %v2042
  %2064 = vmatprep.subr.bf16.mxu0 0
  %2065 = vmatpush1.bf16.msra.mxu0 %v2043
  %2066 = vmatprep.subr.bf16.mxu0 0
  %2067 = vmatpush1.bf16.msra.mxu0 %v2044
  %2068 = vmatprep.subr.bf16.mxu0 0
  %2069 = vmatpush1.bf16.msra.mxu0 %v2045
  %2070 = vmatprep.subr.bf16.mxu0 0
  %2071 = vmatpush1.bf16.msra.mxu0 0
  %2072 = vmatprep.subr.bf16.mxu0 0
  %2073 = vmatpush1.bf16.msra.mxu0 0
  %2074 = vmatprep.subr.bf16.mxu0 0
  %2075 = vmatpush1.bf16.msra.mxu0 0
  %2076 = vmatprep.subr.bf16.mxu0 0
  %2077 = vmatpush1.bf16.msra.mxu0 0
  %2078 = vmatprep.subr.bf16.mxu0 0
  %2079 = vmatpush1.bf16.msra.mxu0 0
  %2080 = vmatprep.subr.bf16.mxu0 0
  %2081 = vmatpush1.bf16.msra.mxu0 0
  %2082 = vmatprep.subr.bf16.mxu0 0
  %2083 = vmatpush1.bf16.msra.mxu0 0
  %2084 = vmatprep.subr.bf16.mxu0 0
  %2085 = vmatpush1.bf16.msra.mxu0 0
  %2086 = vmatprep.mubr.bf16.mxu0 0
  %2087 = vmatmul.mubr.bf16.gmra.mrb[0].mxu0 %v1984
  %v2088 = vpop.f32.mrb[0].mxu0
  %v2089 = vadd.f32 %v2005, %v2088
  %v2090 = vpop.f32.mrb[0].mxu0
  %v2091 = vpop.f32.mrb[0].mxu0
  %v2092 = vpop.f32.mrb[0].mxu0
  %2093 = vdwg.mxu0
  %2094 = vst [vmem:[%s5] sm:$0xff] %v2089
  // Predicated region
  $region22: #{conv_qnet_forward.1} parent=0 // pred_check
    _
  $region23: #{conv_qnet_forward.1} parent=0 // pred_check_branch
    %2096 = sbr.rel (0) target = $region25
  $region24: #{conv_qnet_forward.1} parent=0 // pred_region
    _
  $region25: #{conv_qnet_forward.1} parent=0 // pred_fallthru
    _
  // Predicated region
  $region26: #{conv_qnet_forward.1} parent=0 // pred_check
    _
  $region27: #{conv_qnet_forward.1} parent=0 // pred_check_branch
    %2098 = sbr.rel (0) target = $region29
  $region28: #{conv_qnet_forward.1} parent=0 // pred_region
    _
  $region29: #{conv_qnet_forward.1} parent=0 // pred_fallthru
    _

</llo_original>
